<compile_context>
chip_gen: v7x
topology: tpu7x:2x2x1
jax: 0.10.0
libtpu: 0.0.40
codegen_flags: <defaults>
</compile_context>

<pallas_src>
import numpy as np
import jax
import jax.numpy as jnp
from jax import lax
from jax.experimental import pallas as pl
from jax.experimental.pallas import tpu as pltpu

_K = 4  # every ConvTranspose2d has kernel_size = 4
# (C_in, C_out, stride, padding, activation)
_CONVS = [
    (64, 32, 1, 0, "relu"),
    (32, 16, 2, 1, "relu"),
    (16, 8, 2, 1, "relu"),
    (8, 4, 2, 1, "relu"),
    (4, 1, 2, 1, "sigmoid"),
]


def _layer_geometry():
    geom = []
    n = 1  # spatial size after Reshape(64, 1, 1)
    for (cin, cout, s, p, act) in _CONVS:
        n_out = (n - 1) * s - 2 * p + _K  # PyTorch ConvTranspose2d output size
        geom.append((cin, cout, n, n_out, s, p, act))
        n = n_out
    return tuple(geom)


_GEOM = _layer_geometry()      # spatial: 1 -> 4 -> 8 -> 16 -> 32 -> 64
_P = 128                       # per-ky lane block width (cout*n_out, padded to 128)
_NLAYERS = len(_CONVS)


def _round_up(v, m):
    return (v + m - 1) // m * m


# ------------------------------ Pallas kernel ------------------------------ #

def _make_decoder_kernel(neck, neck_pad):
    f32, bf16 = jnp.float32, jnp.bfloat16

    def kernel(x_ref, w_ref, b_ref, o_ref):
        # -------- Linear(neck, 64) folded into ConvT0 (64->32, 1x1 -> 4x4) --------
        x = x_ref[...].astype(bf16)                                    # (1, neck)
        a0 = jnp.dot(x, w_ref[0:neck, :], preferred_element_type=f32)  # (1, 4*128)
        a0 = a0 + b_ref[0:1, :]          # lin-bias fold + conv0 bias, lanes = (ky, co, ox)
        # layer-0 row scatter is a pure select (oy == ky): assemble (4, 128)
        h = None
        for ky in range(_K):
            sel = (lax.broadcasted_iota(jnp.int32, (_K, 1), 0) == ky).astype(f32)
            term = sel * a0[:, _P * ky:_P * (ky + 1)]                  # (4,1)*(1,128)
            h = term if h is None else h + term
        h = jnp.maximum(h, 0.0)          # (4, 128): rows = y, lanes = c*W + x

        # -------- ConvT layers 1..4, activations stay (rows = y, lanes = c*W+x) ----
        for l in range(1, _NLAYERS):
            _cin, cout, n_in, n_out, s, p, act = _GEOM[l]
            off = neck_pad + (l - 1) * 128
            wl = w_ref[off:off + 128, :]                               # (128, 512) bf16
            # step 1: contract (c_in, x_in) = 128; lanes of `a` are (ky, c_out, x_out)
            a = jnp.dot(h.astype(bf16), wl,
                        preferred_element_type=f32).astype(bf16)       # (n_in, 512)
            # step 2: four independent tiny 0/1 matmuls scatter rows oy = s*iy - p + ky
            y = None
            for ky in range(_K):
                oy = lax.broadcasted_iota(jnp.int32, (n_out, n_in), 0)
                iy = lax.broadcasted_iota(jnp.int32, (n_out, n_in), 1)
                m2 = jnp.where(oy == s * iy - p + ky, 1.0, 0.0).astype(bf16)
                t = jnp.dot(m2, a[:, _P * ky:_P * (ky + 1)],
                            preferred_element_type=f32)                # (n_out, 128)
                y = t if y is None else y + t
            y = y + b_ref[1:2, _P * (l - 1):_P * l]                    # bias over (c_out, x)
            if act == "relu":
                h = jnp.maximum(y, 0.0)
            else:  # final layer: valid lanes are the first cout*n_out (= 64) -> image
                ys = y[:, 0:cout * n_out]                              # (64, 64) = img[y, x]
                o_ref[...] = pl.reciprocal(1.0 + jnp.exp(-ys), approx=True)

    return kernel


# --------------------------- params & packing ------------------------------ #

def init_decoder_params(neck, key):
    """Synthetic PyTorch-layout params (uniform(+-1/sqrt(fan_in)), like nn defaults)."""
    keys = jax.random.split(key, 2 + 2 * _NLAYERS)

    def u(k, shape, fan_in):
        bound = 1.0 / float(fan_in) ** 0.5
        return jax.random.uniform(k, shape, jnp.float32, -bound, bound)

    params = {
        "lin_w": u(keys[0], (64, neck), neck),   # PyTorch Linear weight: (out, in)
        "lin_b": u(keys[1], (64,), neck),
    }
    for i, (cin, cout, _, _, _) in enumerate(_CONVS):
        fan_in = cin * _K * _K
        params[f"ct{i}_w"] = u(keys[2 + 2 * i], (cin, cout, _K, _K), fan_in)
        params[f"ct{i}_b"] = u(keys[3 + 2 * i], (cout,), fan_in)
    return params


def pack_decoder_params(params):
    """One-time repack: fold the Linear into layer 0 and build matmul-ready blobs.

    Kernel activation layout is (rows = spatial y, lanes = c*W + x).  Each layer is
      A = h @ W_l   with W_l[(ci*n_in+ix), ky*128 + co*n_out + ox] = w[ci,co,ky,ox+p-s*ix]
    followed by 4 tiny 0/1 matmuls that scatter rows oy = s*iy - p + ky.
    """
    lin_w = np.asarray(params["lin_w"], np.float32)         # (64, neck)
    lin_b = np.asarray(params["lin_b"], np.float32)         # (64,)
    neck = int(lin_w.shape[1])
    neck_pad = _round_up(max(neck, 8), 128)                 # keeps layer blocks 128-aligned

    # --- layer 0 (1x1 input): ky = oy, kx = ox; fold the Linear weight & bias in.
    cin0, cout0, _n_in0, n_out0, _s0, _p0, _a0 = _GEOM[0]
    w0 = np.asarray(params["ct0_w"], np.float32)            # (64, 32, 4, 4)
    b0 = np.asarray(params["ct0_b"], np.float32)            # (32,)
    m1_0 = np.transpose(w0, (0, 2, 1, 3)).reshape(cin0, _K * cout0 * n_out0)
    assert cout0 * n_out0 == _P
    w0_fold = lin_w.T @ m1_0                                 # (neck, 512)
    bias0 = lin_b @ m1_0 + np.tile(np.repeat(b0, n_out0), _K)   # (512,)

    blocks = [np.zeros((neck_pad, _K * _P), np.float32)]
    blocks[0][:neck] = w0_fold
    bias_row1 = np.zeros(_K * _P, np.float32)

    for l in range(1, _NLAYERS):
        cin, cout, n_in, n_out, s, p, _act = _GEOM[l]
        assert cin * n_in == 128 and cout * n_out <= _P
        w = np.asarray(params[f"ct{l}_w"], np.float32)       # (cin, cout, 4, 4)
        b = np.asarray(params[f"ct{l}_b"], np.float32)       # (cout,)
        m1 = np.zeros((cin, n_in, _K, cout, n_out), np.float32)
        for ox in range(n_out):
            for ix in range(n_in):
                kx = ox + p - s * ix
                if 0 <= kx < _K:
                    m1[:, ix, :, :, ox] = np.transpose(w[:, :, :, kx], (0, 2, 1))
        m1 = m1.reshape(cin * n_in, _K, cout * n_out)
        m1p = np.zeros((cin * n_in, _K, _P), np.float32)
        m1p[:, :, :cout * n_out] = m1
        blocks.append(m1p.reshape(cin * n_in, _K * _P))
        bias_row1[(l - 1) * _P:(l - 1) * _P + cout * n_out] = np.repeat(b, n_out)

    # weights in bf16 (halves the per-call HBM->VMEM DMA; exact-enough), biases f32
    wblob = jnp.asarray(np.concatenate(blocks, axis=0), dtype=jnp.bfloat16)
    bblob = jnp.asarray(np.stack([bias0, bias_row1], axis=0), dtype=jnp.float32)
    return {"wblob": wblob, "bblob": bblob}


# ------------------------------ forward pass ------------------------------- #

@jax.jit
def decoder_forward(packed, x):
    """Decoder forward: x.view(neck) -> (1, 64, 64), one fused Pallas kernel."""
    wblob, bblob = packed["wblob"], packed["bblob"]
    neck = x.size                                            # static under jit
    neck_pad = wblob.shape[0] - (_NLAYERS - 1) * 128
    x_row = x.reshape(1, neck).astype(jnp.float32)
    out = pl.pallas_call(
        _make_decoder_kernel(neck, neck_pad),
        out_shape=jax.ShapeDtypeStruct((64, 64), jnp.float32),
        in_specs=[pl.BlockSpec(memory_space=pltpu.MemorySpace.VMEM)] * 3,
        out_specs=pl.BlockSpec(memory_space=pltpu.MemorySpace.VMEM),
    )(x_row, wblob, bblob)
    # TODO(synk): if multiple latents are decoded per step, batch them onto the
    # lane axis (or a 'parallel' grid axis) to use v7x's second TensorCore.
    return out.reshape(1, 64, 64)


# ----------------------------- XLA reference -------------------------------- #

def _reference_forward(params, x):
    """Pure-XLA reference with PyTorch ConvTranspose2d semantics (for checking)."""
    h = x.reshape(-1) @ params["lin_w"].T + params["lin_b"]
    h = h.reshape(1, 64, 1, 1)                                   # NCHW
    for l, (cin, cout, s, p, act) in enumerate(_CONVS):
        w = params[f"ct{l}_w"]                                   # (C_in, C_out, k, k)
        w_conv = jnp.transpose(jnp.flip(w, (2, 3)), (1, 0, 2, 3))    # OIHW
        pad = _K - 1 - p
        h = lax.conv_general_dilated(
            h, w_conv, window_strides=(1, 1),
            padding=[(pad, pad), (pad, pad)], lhs_dilation=(s, s),
            dimension_numbers=("NCHW", "OIHW", "NCHW"))
        h = h + params[f"ct{l}_b"].reshape(1, cout, 1, 1)
        h = jnp.maximum(h, 0.0) if act == "relu" else jax.nn.sigmoid(h)
    return h[0]                                                  # (1, 64, 64)


# --------------------------------- main ------------------------------------ #

if __name__ == "__main__":
    neck = 32
    key = jax.random.PRNGKey(0)
    k_params, k_x = jax.random.split(key)

    params = init_decoder_params(neck, k_params)
    packed = pack_decoder_params(params)                  # one-time weight repack
    x = jax.random.normal(k_x, (1, neck), jnp.float32)    # any shape viewing to (neck,)

    out = decoder_forward(packed, x)
    out = jax.block_until_ready(out)

    assert out.shape == (1, 64, 64), out.shape
    assert out.dtype == jnp.float32
    assert bool(jnp.all((out >= 0.0) & (out <= 1.0)))     # sigmoid output range

    ref = _reference_forward(params, x)
    max_err = float(jnp.max(jnp.abs(out - ref)))
    assert max_err < 1e-2, f"mismatch vs XLA reference: max_err={max_err}"

    print("KERNEL_OK")
</pallas_src>

<mosaic_0001>
module attributes {stable_mosaic.version = 11 : i64} {
  func.func @kernel(%arg0: memref<1x32xf32, #tpu.memory_space<vmem>>, %arg1: memref<640x512xbf16, #tpu.memory_space<vmem>>, %arg2: memref<2x512xf32, #tpu.memory_space<vmem>>, %arg3: memref<64x64xf32, #tpu.memory_space<vmem>>) attributes {dimension_semantics = [], scalar_prefetch = 0 : i64, scratch_operands = 0 : i64, tpu.core_type = #tpu.core_type<tc>} {
    %c0 = arith.constant 0 : index
    %c0_0 = arith.constant 0 : index
    %0 = vector.load %arg0[%c0, %c0_0] : memref<1x32xf32, #tpu.memory_space<vmem>>, vector<1x32xf32>
    %1 = arith.truncf %0 : vector<1x32xf32> to vector<1x32xbf16>
    %c0_1 = arith.constant 0 : index
    %c0_2 = arith.constant 0 : index
    %2 = vector.load %arg1[%c0_1, %c0_2] : memref<640x512xbf16, #tpu.memory_space<vmem>>, vector<32x512xbf16>
    %cst = arith.constant dense<0.000000e+00> : vector<1x512xf32>
    %3 = tpu.matmul %1, %2, %cst {dimension_numbers = #tpu.dot_dimension_numbers<[1], [0], [0], [1], [0, 0, 1, 1], [], []>} : vector<1x32xbf16>, vector<32x512xbf16>, vector<1x512xf32> -> vector<1x512xf32>
    %c0_3 = arith.constant 0 : index
    %c0_4 = arith.constant 0 : index
    %4 = vector.load %arg2[%c0_3, %c0_4] : memref<2x512xf32, #tpu.memory_space<vmem>>, vector<1x512xf32>
    %5 = arith.addf %3, %4 : vector<1x512xf32>
    %6 = tpu.iota {dimensions = array<i32: 0>} : vector<4x1xi32>
    %c0_i32 = arith.constant 0 : i32
    %7 = vector.broadcast %c0_i32 : i32 to vector<4x1xi32>
    %8 = arith.cmpi eq, %6, %7 : vector<4x1xi32>
    %9 = arith.extui %8 : vector<4x1xi1> to vector<4x1xi32>
    %10 = arith.sitofp %9 : vector<4x1xi32> to vector<4x1xf32>
    %11 = vector.extract_strided_slice %5 {offsets = [0, 0], sizes = [1, 128], strides = [1, 1]} : vector<1x512xf32> to vector<1x128xf32>
    %12 = vector.broadcast %10 : vector<4x1xf32> to vector<4x128xf32>
    %13 = vector.broadcast %11 : vector<1x128xf32> to vector<4x128xf32>
    %14 = arith.mulf %12, %13 : vector<4x128xf32>
    %15 = tpu.iota {dimensions = array<i32: 0>} : vector<4x1xi32>
    %c1_i32 = arith.constant 1 : i32
    %16 = vector.broadcast %c1_i32 : i32 to vector<4x1xi32>
    %17 = arith.cmpi eq, %15, %16 : vector<4x1xi32>
    %18 = arith.extui %17 : vector<4x1xi1> to vector<4x1xi32>
    %19 = arith.sitofp %18 : vector<4x1xi32> to vector<4x1xf32>
    %20 = vector.extract_strided_slice %5 {offsets = [0, 128], sizes = [1, 128], strides = [1, 1]} : vector<1x512xf32> to vector<1x128xf32>
    %21 = vector.broadcast %19 : vector<4x1xf32> to vector<4x128xf32>
    %22 = vector.broadcast %20 : vector<1x128xf32> to vector<4x128xf32>
    %23 = arith.mulf %21, %22 : vector<4x128xf32>
    %24 = arith.addf %14, %23 : vector<4x128xf32>
    %25 = tpu.iota {dimensions = array<i32: 0>} : vector<4x1xi32>
    %c2_i32 = arith.constant 2 : i32
    %26 = vector.broadcast %c2_i32 : i32 to vector<4x1xi32>
    %27 = arith.cmpi eq, %25, %26 : vector<4x1xi32>
    %28 = arith.extui %27 : vector<4x1xi1> to vector<4x1xi32>
    %29 = arith.sitofp %28 : vector<4x1xi32> to vector<4x1xf32>
    %30 = vector.extract_strided_slice %5 {offsets = [0, 256], sizes = [1, 128], strides = [1, 1]} : vector<1x512xf32> to vector<1x128xf32>
    %31 = vector.broadcast %29 : vector<4x1xf32> to vector<4x128xf32>
    %32 = vector.broadcast %30 : vector<1x128xf32> to vector<4x128xf32>
    %33 = arith.mulf %31, %32 : vector<4x128xf32>
    %34 = arith.addf %24, %33 : vector<4x128xf32>
    %35 = tpu.iota {dimensions = array<i32: 0>} : vector<4x1xi32>
    %c3_i32 = arith.constant 3 : i32
    %36 = vector.broadcast %c3_i32 : i32 to vector<4x1xi32>
    %37 = arith.cmpi eq, %35, %36 : vector<4x1xi32>
    %38 = arith.extui %37 : vector<4x1xi1> to vector<4x1xi32>
    %39 = arith.sitofp %38 : vector<4x1xi32> to vector<4x1xf32>
    %40 = vector.extract_strided_slice %5 {offsets = [0, 384], sizes = [1, 128], strides = [1, 1]} : vector<1x512xf32> to vector<1x128xf32>
    %41 = vector.broadcast %39 : vector<4x1xf32> to vector<4x128xf32>
    %42 = vector.broadcast %40 : vector<1x128xf32> to vector<4x128xf32>
    %43 = arith.mulf %41, %42 : vector<4x128xf32>
    %44 = arith.addf %34, %43 : vector<4x128xf32>
    %cst_5 = arith.constant 0.000000e+00 : f32
    %45 = vector.broadcast %cst_5 : f32 to vector<4x128xf32>
    %46 = arith.maximumf %44, %45 : vector<4x128xf32>
    %c128 = arith.constant 128 : index
    %c0_6 = arith.constant 0 : index
    %47 = vector.load %arg1[%c128, %c0_6] : memref<640x512xbf16, #tpu.memory_space<vmem>>, vector<128x512xbf16>
    %48 = arith.truncf %46 : vector<4x128xf32> to vector<4x128xbf16>
    %cst_7 = arith.constant dense<0.000000e+00> : vector<4x512xf32>
    %49 = tpu.matmul %48, %47, %cst_7 {dimension_numbers = #tpu.dot_dimension_numbers<[1], [0], [0], [1], [0, 0, 1, 1], [], []>} : vector<4x128xbf16>, vector<128x512xbf16>, vector<4x512xf32> -> vector<4x512xf32>
    %50 = arith.truncf %49 : vector<4x512xf32> to vector<4x512xbf16>
    %51 = tpu.iota {dimensions = array<i32: 0>} : vector<8x4xi32>
    %52 = tpu.iota {dimensions = array<i32: 1>} : vector<8x4xi32>
    %c2_i32_8 = arith.constant 2 : i32
    %53 = vector.broadcast %c2_i32_8 : i32 to vector<8x4xi32>
    %54 = arith.muli %53, %52 : vector<8x4xi32>
    %c1_i32_9 = arith.constant 1 : i32
    %55 = vector.broadcast %c1_i32_9 : i32 to vector<8x4xi32>
    %56 = arith.subi %54, %55 : vector<8x4xi32>
    %c0_i32_10 = arith.constant 0 : i32
    %57 = vector.broadcast %c0_i32_10 : i32 to vector<8x4xi32>
    %58 = arith.addi %56, %57 : vector<8x4xi32>
    %59 = arith.cmpi eq, %51, %58 : vector<8x4xi32>
    %cst_11 = arith.constant 1.000000e+00 : f32
    %cst_12 = arith.constant 0.000000e+00 : f32
    %60 = vector.broadcast %cst_11 : f32 to vector<8x4xf32>
    %61 = vector.broadcast %cst_12 : f32 to vector<8x4xf32>
    %62 = arith.select %59, %60, %61 : vector<8x4xi1>, vector<8x4xf32>
    %63 = arith.truncf %62 : vector<8x4xf32> to vector<8x4xbf16>
    %64 = vector.extract_strided_slice %50 {offsets = [0, 0], sizes = [4, 128], strides = [1, 1]} : vector<4x512xbf16> to vector<4x128xbf16>
    %cst_13 = arith.constant dense<0.000000e+00> : vector<8x128xf32>
    %65 = tpu.matmul %63, %64, %cst_13 {dimension_numbers = #tpu.dot_dimension_numbers<[1], [0], [0], [1], [0, 0, 1, 1], [], []>} : vector<8x4xbf16>, vector<4x128xbf16>, vector<8x128xf32> -> vector<8x128xf32>
    %66 = tpu.iota {dimensions = array<i32: 0>} : vector<8x4xi32>
    %67 = tpu.iota {dimensions = array<i32: 1>} : vector<8x4xi32>
    %c2_i32_14 = arith.constant 2 : i32
    %68 = vector.broadcast %c2_i32_14 : i32 to vector<8x4xi32>
    %69 = arith.muli %68, %67 : vector<8x4xi32>
    %c1_i32_15 = arith.constant 1 : i32
    %70 = vector.broadcast %c1_i32_15 : i32 to vector<8x4xi32>
    %71 = arith.subi %69, %70 : vector<8x4xi32>
    %c1_i32_16 = arith.constant 1 : i32
    %72 = vector.broadcast %c1_i32_16 : i32 to vector<8x4xi32>
    %73 = arith.addi %71, %72 : vector<8x4xi32>
    %74 = arith.cmpi eq, %66, %73 : vector<8x4xi32>
    %cst_17 = arith.constant 1.000000e+00 : f32
    %cst_18 = arith.constant 0.000000e+00 : f32
    %75 = vector.broadcast %cst_17 : f32 to vector<8x4xf32>
    %76 = vector.broadcast %cst_18 : f32 to vector<8x4xf32>
    %77 = arith.select %74, %75, %76 : vector<8x4xi1>, vector<8x4xf32>
    %78 = arith.truncf %77 : vector<8x4xf32> to vector<8x4xbf16>
    %79 = vector.extract_strided_slice %50 {offsets = [0, 128], sizes = [4, 128], strides = [1, 1]} : vector<4x512xbf16> to vector<4x128xbf16>
    %cst_19 = arith.constant dense<0.000000e+00> : vector<8x128xf32>
    %80 = tpu.matmul %78, %79, %cst_19 {dimension_numbers = #tpu.dot_dimension_numbers<[1], [0], [0], [1], [0, 0, 1, 1], [], []>} : vector<8x4xbf16>, vector<4x128xbf16>, vector<8x128xf32> -> vector<8x128xf32>
    %81 = arith.addf %65, %80 : vector<8x128xf32>
    %82 = tpu.iota {dimensions = array<i32: 0>} : vector<8x4xi32>
    %83 = tpu.iota {dimensions = array<i32: 1>} : vector<8x4xi32>
    %c2_i32_20 = arith.constant 2 : i32
    %84 = vector.broadcast %c2_i32_20 : i32 to vector<8x4xi32>
    %85 = arith.muli %84, %83 : vector<8x4xi32>
    %c1_i32_21 = arith.constant 1 : i32
    %86 = vector.broadcast %c1_i32_21 : i32 to vector<8x4xi32>
    %87 = arith.subi %85, %86 : vector<8x4xi32>
    %c2_i32_22 = arith.constant 2 : i32
    %88 = vector.broadcast %c2_i32_22 : i32 to vector<8x4xi32>
    %89 = arith.addi %87, %88 : vector<8x4xi32>
    %90 = arith.cmpi eq, %82, %89 : vector<8x4xi32>
    %cst_23 = arith.constant 1.000000e+00 : f32
    %cst_24 = arith.constant 0.000000e+00 : f32
    %91 = vector.broadcast %cst_23 : f32 to vector<8x4xf32>
    %92 = vector.broadcast %cst_24 : f32 to vector<8x4xf32>
    %93 = arith.select %90, %91, %92 : vector<8x4xi1>, vector<8x4xf32>
    %94 = arith.truncf %93 : vector<8x4xf32> to vector<8x4xbf16>
    %95 = vector.extract_strided_slice %50 {offsets = [0, 256], sizes = [4, 128], strides = [1, 1]} : vector<4x512xbf16> to vector<4x128xbf16>
    %cst_25 = arith.constant dense<0.000000e+00> : vector<8x128xf32>
    %96 = tpu.matmul %94, %95, %cst_25 {dimension_numbers = #tpu.dot_dimension_numbers<[1], [0], [0], [1], [0, 0, 1, 1], [], []>} : vector<8x4xbf16>, vector<4x128xbf16>, vector<8x128xf32> -> vector<8x128xf32>
    %97 = arith.addf %81, %96 : vector<8x128xf32>
    %98 = tpu.iota {dimensions = array<i32: 0>} : vector<8x4xi32>
    %99 = tpu.iota {dimensions = array<i32: 1>} : vector<8x4xi32>
    %c2_i32_26 = arith.constant 2 : i32
    %100 = vector.broadcast %c2_i32_26 : i32 to vector<8x4xi32>
    %101 = arith.muli %100, %99 : vector<8x4xi32>
    %c1_i32_27 = arith.constant 1 : i32
    %102 = vector.broadcast %c1_i32_27 : i32 to vector<8x4xi32>
    %103 = arith.subi %101, %102 : vector<8x4xi32>
    %c3_i32_28 = arith.constant 3 : i32
    %104 = vector.broadcast %c3_i32_28 : i32 to vector<8x4xi32>
    %105 = arith.addi %103, %104 : vector<8x4xi32>
    %106 = arith.cmpi eq, %98, %105 : vector<8x4xi32>
    %cst_29 = arith.constant 1.000000e+00 : f32
    %cst_30 = arith.constant 0.000000e+00 : f32
    %107 = vector.broadcast %cst_29 : f32 to vector<8x4xf32>
    %108 = vector.broadcast %cst_30 : f32 to vector<8x4xf32>
    %109 = arith.select %106, %107, %108 : vector<8x4xi1>, vector<8x4xf32>
    %110 = arith.truncf %109 : vector<8x4xf32> to vector<8x4xbf16>
    %111 = vector.extract_strided_slice %50 {offsets = [0, 384], sizes = [4, 128], strides = [1, 1]} : vector<4x512xbf16> to vector<4x128xbf16>
    %cst_31 = arith.constant dense<0.000000e+00> : vector<8x128xf32>
    %112 = tpu.matmul %110, %111, %cst_31 {dimension_numbers = #tpu.dot_dimension_numbers<[1], [0], [0], [1], [0, 0, 1, 1], [], []>} : vector<8x4xbf16>, vector<4x128xbf16>, vector<8x128xf32> -> vector<8x128xf32>
    %113 = arith.addf %97, %112 : vector<8x128xf32>
    %c1 = arith.constant 1 : index
    %c0_32 = arith.constant 0 : index
    %114 = vector.load %arg2[%c1, %c0_32] : memref<2x512xf32, #tpu.memory_space<vmem>>, vector<1x128xf32>
    %115 = vector.broadcast %114 : vector<1x128xf32> to vector<8x128xf32>
    %116 = arith.addf %113, %115 : vector<8x128xf32>
    %cst_33 = arith.constant 0.000000e+00 : f32
    %117 = vector.broadcast %cst_33 : f32 to vector<8x128xf32>
    %118 = arith.maximumf %116, %117 : vector<8x128xf32>
    %c256 = arith.constant 256 : index
    %c0_34 = arith.constant 0 : index
    %119 = vector.load %arg1[%c256, %c0_34] : memref<640x512xbf16, #tpu.memory_space<vmem>>, vector<128x512xbf16>
    %120 = arith.truncf %118 : vector<8x128xf32> to vector<8x128xbf16>
    %cst_35 = arith.constant dense<0.000000e+00> : vector<8x512xf32>
    %121 = tpu.matmul %120, %119, %cst_35 {dimension_numbers = #tpu.dot_dimension_numbers<[1], [0], [0], [1], [0, 0, 1, 1], [], []>} : vector<8x128xbf16>, vector<128x512xbf16>, vector<8x512xf32> -> vector<8x512xf32>
    %122 = arith.truncf %121 : vector<8x512xf32> to vector<8x512xbf16>
    %123 = tpu.iota {dimensions = array<i32: 0>} : vector<16x8xi32>
    %124 = tpu.iota {dimensions = array<i32: 1>} : vector<16x8xi32>
    %c2_i32_36 = arith.constant 2 : i32
    %125 = vector.broadcast %c2_i32_36 : i32 to vector<16x8xi32>
    %126 = arith.muli %125, %124 : vector<16x8xi32>
    %c1_i32_37 = arith.constant 1 : i32
    %127 = vector.broadcast %c1_i32_37 : i32 to vector<16x8xi32>
    %128 = arith.subi %126, %127 : vector<16x8xi32>
    %c0_i32_38 = arith.constant 0 : i32
    %129 = vector.broadcast %c0_i32_38 : i32 to vector<16x8xi32>
    %130 = arith.addi %128, %129 : vector<16x8xi32>
    %131 = arith.cmpi eq, %123, %130 : vector<16x8xi32>
    %cst_39 = arith.constant 1.000000e+00 : f32
    %cst_40 = arith.constant 0.000000e+00 : f32
    %132 = vector.broadcast %cst_39 : f32 to vector<16x8xf32>
    %133 = vector.broadcast %cst_40 : f32 to vector<16x8xf32>
    %134 = arith.select %131, %132, %133 : vector<16x8xi1>, vector<16x8xf32>
    %135 = arith.truncf %134 : vector<16x8xf32> to vector<16x8xbf16>
    %136 = vector.extract_strided_slice %122 {offsets = [0, 0], sizes = [8, 128], strides = [1, 1]} : vector<8x512xbf16> to vector<8x128xbf16>
    %cst_41 = arith.constant dense<0.000000e+00> : vector<16x128xf32>
    %137 = tpu.matmul %135, %136, %cst_41 {dimension_numbers = #tpu.dot_dimension_numbers<[1], [0], [0], [1], [0, 0, 1, 1], [], []>} : vector<16x8xbf16>, vector<8x128xbf16>, vector<16x128xf32> -> vector<16x128xf32>
    %138 = tpu.iota {dimensions = array<i32: 0>} : vector<16x8xi32>
    %139 = tpu.iota {dimensions = array<i32: 1>} : vector<16x8xi32>
    %c2_i32_42 = arith.constant 2 : i32
    %140 = vector.broadcast %c2_i32_42 : i32 to vector<16x8xi32>
    %141 = arith.muli %140, %139 : vector<16x8xi32>
    %c1_i32_43 = arith.constant 1 : i32
    %142 = vector.broadcast %c1_i32_43 : i32 to vector<16x8xi32>
    %143 = arith.subi %141, %142 : vector<16x8xi32>
    %c1_i32_44 = arith.constant 1 : i32
    %144 = vector.broadcast %c1_i32_44 : i32 to vector<16x8xi32>
    %145 = arith.addi %143, %144 : vector<16x8xi32>
    %146 = arith.cmpi eq, %138, %145 : vector<16x8xi32>
    %cst_45 = arith.constant 1.000000e+00 : f32
    %cst_46 = arith.constant 0.000000e+00 : f32
    %147 = vector.broadcast %cst_45 : f32 to vector<16x8xf32>
    %148 = vector.broadcast %cst_46 : f32 to vector<16x8xf32>
    %149 = arith.select %146, %147, %148 : vector<16x8xi1>, vector<16x8xf32>
    %150 = arith.truncf %149 : vector<16x8xf32> to vector<16x8xbf16>
    %151 = vector.extract_strided_slice %122 {offsets = [0, 128], sizes = [8, 128], strides = [1, 1]} : vector<8x512xbf16> to vector<8x128xbf16>
    %cst_47 = arith.constant dense<0.000000e+00> : vector<16x128xf32>
    %152 = tpu.matmul %150, %151, %cst_47 {dimension_numbers = #tpu.dot_dimension_numbers<[1], [0], [0], [1], [0, 0, 1, 1], [], []>} : vector<16x8xbf16>, vector<8x128xbf16>, vector<16x128xf32> -> vector<16x128xf32>
    %153 = arith.addf %137, %152 : vector<16x128xf32>
    %154 = tpu.iota {dimensions = array<i32: 0>} : vector<16x8xi32>
    %155 = tpu.iota {dimensions = array<i32: 1>} : vector<16x8xi32>
    %c2_i32_48 = arith.constant 2 : i32
    %156 = vector.broadcast %c2_i32_48 : i32 to vector<16x8xi32>
    %157 = arith.muli %156, %155 : vector<16x8xi32>
    %c1_i32_49 = arith.constant 1 : i32
    %158 = vector.broadcast %c1_i32_49 : i32 to vector<16x8xi32>
    %159 = arith.subi %157, %158 : vector<16x8xi32>
    %c2_i32_50 = arith.constant 2 : i32
    %160 = vector.broadcast %c2_i32_50 : i32 to vector<16x8xi32>
    %161 = arith.addi %159, %160 : vector<16x8xi32>
    %162 = arith.cmpi eq, %154, %161 : vector<16x8xi32>
    %cst_51 = arith.constant 1.000000e+00 : f32
    %cst_52 = arith.constant 0.000000e+00 : f32
    %163 = vector.broadcast %cst_51 : f32 to vector<16x8xf32>
    %164 = vector.broadcast %cst_52 : f32 to vector<16x8xf32>
    %165 = arith.select %162, %163, %164 : vector<16x8xi1>, vector<16x8xf32>
    %166 = arith.truncf %165 : vector<16x8xf32> to vector<16x8xbf16>
    %167 = vector.extract_strided_slice %122 {offsets = [0, 256], sizes = [8, 128], strides = [1, 1]} : vector<8x512xbf16> to vector<8x128xbf16>
    %cst_53 = arith.constant dense<0.000000e+00> : vector<16x128xf32>
    %168 = tpu.matmul %166, %167, %cst_53 {dimension_numbers = #tpu.dot_dimension_numbers<[1], [0], [0], [1], [0, 0, 1, 1], [], []>} : vector<16x8xbf16>, vector<8x128xbf16>, vector<16x128xf32> -> vector<16x128xf32>
    %169 = arith.addf %153, %168 : vector<16x128xf32>
    %170 = tpu.iota {dimensions = array<i32: 0>} : vector<16x8xi32>
    %171 = tpu.iota {dimensions = array<i32: 1>} : vector<16x8xi32>
    %c2_i32_54 = arith.constant 2 : i32
    %172 = vector.broadcast %c2_i32_54 : i32 to vector<16x8xi32>
    %173 = arith.muli %172, %171 : vector<16x8xi32>
    %c1_i32_55 = arith.constant 1 : i32
    %174 = vector.broadcast %c1_i32_55 : i32 to vector<16x8xi32>
    %175 = arith.subi %173, %174 : vector<16x8xi32>
    %c3_i32_56 = arith.constant 3 : i32
    %176 = vector.broadcast %c3_i32_56 : i32 to vector<16x8xi32>
    %177 = arith.addi %175, %176 : vector<16x8xi32>
    %178 = arith.cmpi eq, %170, %177 : vector<16x8xi32>
    %cst_57 = arith.constant 1.000000e+00 : f32
    %cst_58 = arith.constant 0.000000e+00 : f32
    %179 = vector.broadcast %cst_57 : f32 to vector<16x8xf32>
    %180 = vector.broadcast %cst_58 : f32 to vector<16x8xf32>
    %181 = arith.select %178, %179, %180 : vector<16x8xi1>, vector<16x8xf32>
    %182 = arith.truncf %181 : vector<16x8xf32> to vector<16x8xbf16>
    %183 = vector.extract_strided_slice %122 {offsets = [0, 384], sizes = [8, 128], strides = [1, 1]} : vector<8x512xbf16> to vector<8x128xbf16>
    %cst_59 = arith.constant dense<0.000000e+00> : vector<16x128xf32>
    %184 = tpu.matmul %182, %183, %cst_59 {dimension_numbers = #tpu.dot_dimension_numbers<[1], [0], [0], [1], [0, 0, 1, 1], [], []>} : vector<16x8xbf16>, vector<8x128xbf16>, vector<16x128xf32> -> vector<16x128xf32>
    %185 = arith.addf %169, %184 : vector<16x128xf32>
    %c1_60 = arith.constant 1 : index
    %c128_61 = arith.constant 128 : index
    %186 = vector.load %arg2[%c1_60, %c128_61] : memref<2x512xf32, #tpu.memory_space<vmem>>, vector<1x128xf32>
    %187 = vector.broadcast %186 : vector<1x128xf32> to vector<16x128xf32>
    %188 = arith.addf %185, %187 : vector<16x128xf32>
    %cst_62 = arith.constant 0.000000e+00 : f32
    %189 = vector.broadcast %cst_62 : f32 to vector<16x128xf32>
    %190 = arith.maximumf %188, %189 : vector<16x128xf32>
    %c384 = arith.constant 384 : index
    %c0_63 = arith.constant 0 : index
    %191 = vector.load %arg1[%c384, %c0_63] : memref<640x512xbf16, #tpu.memory_space<vmem>>, vector<128x512xbf16>
    %192 = arith.truncf %190 : vector<16x128xf32> to vector<16x128xbf16>
    %cst_64 = arith.constant dense<0.000000e+00> : vector<16x512xf32>
    %193 = tpu.matmul %192, %191, %cst_64 {dimension_numbers = #tpu.dot_dimension_numbers<[1], [0], [0], [1], [0, 0, 1, 1], [], []>} : vector<16x128xbf16>, vector<128x512xbf16>, vector<16x512xf32> -> vector<16x512xf32>
    %194 = arith.truncf %193 : vector<16x512xf32> to vector<16x512xbf16>
    %195 = tpu.iota {dimensions = array<i32: 0>} : vector<32x16xi32>
    %196 = tpu.iota {dimensions = array<i32: 1>} : vector<32x16xi32>
    %c2_i32_65 = arith.constant 2 : i32
    %197 = vector.broadcast %c2_i32_65 : i32 to vector<32x16xi32>
    %198 = arith.muli %197, %196 : vector<32x16xi32>
    %c1_i32_66 = arith.constant 1 : i32
    %199 = vector.broadcast %c1_i32_66 : i32 to vector<32x16xi32>
    %200 = arith.subi %198, %199 : vector<32x16xi32>
    %c0_i32_67 = arith.constant 0 : i32
    %201 = vector.broadcast %c0_i32_67 : i32 to vector<32x16xi32>
    %202 = arith.addi %200, %201 : vector<32x16xi32>
    %203 = arith.cmpi eq, %195, %202 : vector<32x16xi32>
    %cst_68 = arith.constant 1.000000e+00 : f32
    %cst_69 = arith.constant 0.000000e+00 : f32
    %204 = vector.broadcast %cst_68 : f32 to vector<32x16xf32>
    %205 = vector.broadcast %cst_69 : f32 to vector<32x16xf32>
    %206 = arith.select %203, %204, %205 : vector<32x16xi1>, vector<32x16xf32>
    %207 = arith.truncf %206 : vector<32x16xf32> to vector<32x16xbf16>
    %208 = vector.extract_strided_slice %194 {offsets = [0, 0], sizes = [16, 128], strides = [1, 1]} : vector<16x512xbf16> to vector<16x128xbf16>
    %cst_70 = arith.constant dense<0.000000e+00> : vector<32x128xf32>
    %209 = tpu.matmul %207, %208, %cst_70 {dimension_numbers = #tpu.dot_dimension_numbers<[1], [0], [0], [1], [0, 0, 1, 1], [], []>} : vector<32x16xbf16>, vector<16x128xbf16>, vector<32x128xf32> -> vector<32x128xf32>
    %210 = tpu.iota {dimensions = array<i32: 0>} : vector<32x16xi32>
    %211 = tpu.iota {dimensions = array<i32: 1>} : vector<32x16xi32>
    %c2_i32_71 = arith.constant 2 : i32
    %212 = vector.broadcast %c2_i32_71 : i32 to vector<32x16xi32>
    %213 = arith.muli %212, %211 : vector<32x16xi32>
    %c1_i32_72 = arith.constant 1 : i32
    %214 = vector.broadcast %c1_i32_72 : i32 to vector<32x16xi32>
    %215 = arith.subi %213, %214 : vector<32x16xi32>
    %c1_i32_73 = arith.constant 1 : i32
    %216 = vector.broadcast %c1_i32_73 : i32 to vector<32x16xi32>
    %217 = arith.addi %215, %216 : vector<32x16xi32>
    %218 = arith.cmpi eq, %210, %217 : vector<32x16xi32>
    %cst_74 = arith.constant 1.000000e+00 : f32
    %cst_75 = arith.constant 0.000000e+00 : f32
    %219 = vector.broadcast %cst_74 : f32 to vector<32x16xf32>
    %220 = vector.broadcast %cst_75 : f32 to vector<32x16xf32>
    %221 = arith.select %218, %219, %220 : vector<32x16xi1>, vector<32x16xf32>
    %222 = arith.truncf %221 : vector<32x16xf32> to vector<32x16xbf16>
    %223 = vector.extract_strided_slice %194 {offsets = [0, 128], sizes = [16, 128], strides = [1, 1]} : vector<16x512xbf16> to vector<16x128xbf16>
    %cst_76 = arith.constant dense<0.000000e+00> : vector<32x128xf32>
    %224 = tpu.matmul %222, %223, %cst_76 {dimension_numbers = #tpu.dot_dimension_numbers<[1], [0], [0], [1], [0, 0, 1, 1], [], []>} : vector<32x16xbf16>, vector<16x128xbf16>, vector<32x128xf32> -> vector<32x128xf32>
    %225 = arith.addf %209, %224 : vector<32x128xf32>
    %226 = tpu.iota {dimensions = array<i32: 0>} : vector<32x16xi32>
    %227 = tpu.iota {dimensions = array<i32: 1>} : vector<32x16xi32>
    %c2_i32_77 = arith.constant 2 : i32
    %228 = vector.broadcast %c2_i32_77 : i32 to vector<32x16xi32>
    %229 = arith.muli %228, %227 : vector<32x16xi32>
    %c1_i32_78 = arith.constant 1 : i32
    %230 = vector.broadcast %c1_i32_78 : i32 to vector<32x16xi32>
    %231 = arith.subi %229, %230 : vector<32x16xi32>
    %c2_i32_79 = arith.constant 2 : i32
    %232 = vector.broadcast %c2_i32_79 : i32 to vector<32x16xi32>
    %233 = arith.addi %231, %232 : vector<32x16xi32>
    %234 = arith.cmpi eq, %226, %233 : vector<32x16xi32>
    %cst_80 = arith.constant 1.000000e+00 : f32
    %cst_81 = arith.constant 0.000000e+00 : f32
    %235 = vector.broadcast %cst_80 : f32 to vector<32x16xf32>
    %236 = vector.broadcast %cst_81 : f32 to vector<32x16xf32>
    %237 = arith.select %234, %235, %236 : vector<32x16xi1>, vector<32x16xf32>
    %238 = arith.truncf %237 : vector<32x16xf32> to vector<32x16xbf16>
    %239 = vector.extract_strided_slice %194 {offsets = [0, 256], sizes = [16, 128], strides = [1, 1]} : vector<16x512xbf16> to vector<16x128xbf16>
    %cst_82 = arith.constant dense<0.000000e+00> : vector<32x128xf32>
    %240 = tpu.matmul %238, %239, %cst_82 {dimension_numbers = #tpu.dot_dimension_numbers<[1], [0], [0], [1], [0, 0, 1, 1], [], []>} : vector<32x16xbf16>, vector<16x128xbf16>, vector<32x128xf32> -> vector<32x128xf32>
    %241 = arith.addf %225, %240 : vector<32x128xf32>
    %242 = tpu.iota {dimensions = array<i32: 0>} : vector<32x16xi32>
    %243 = tpu.iota {dimensions = array<i32: 1>} : vector<32x16xi32>
    %c2_i32_83 = arith.constant 2 : i32
    %244 = vector.broadcast %c2_i32_83 : i32 to vector<32x16xi32>
    %245 = arith.muli %244, %243 : vector<32x16xi32>
    %c1_i32_84 = arith.constant 1 : i32
    %246 = vector.broadcast %c1_i32_84 : i32 to vector<32x16xi32>
    %247 = arith.subi %245, %246 : vector<32x16xi32>
    %c3_i32_85 = arith.constant 3 : i32
    %248 = vector.broadcast %c3_i32_85 : i32 to vector<32x16xi32>
    %249 = arith.addi %247, %248 : vector<32x16xi32>
    %250 = arith.cmpi eq, %242, %249 : vector<32x16xi32>
    %cst_86 = arith.constant 1.000000e+00 : f32
    %cst_87 = arith.constant 0.000000e+00 : f32
    %251 = vector.broadcast %cst_86 : f32 to vector<32x16xf32>
    %252 = vector.broadcast %cst_87 : f32 to vector<32x16xf32>
    %253 = arith.select %250, %251, %252 : vector<32x16xi1>, vector<32x16xf32>
    %254 = arith.truncf %253 : vector<32x16xf32> to vector<32x16xbf16>
    %255 = vector.extract_strided_slice %194 {offsets = [0, 384], sizes = [16, 128], strides = [1, 1]} : vector<16x512xbf16> to vector<16x128xbf16>
    %cst_88 = arith.constant dense<0.000000e+00> : vector<32x128xf32>
    %256 = tpu.matmul %254, %255, %cst_88 {dimension_numbers = #tpu.dot_dimension_numbers<[1], [0], [0], [1], [0, 0, 1, 1], [], []>} : vector<32x16xbf16>, vector<16x128xbf16>, vector<32x128xf32> -> vector<32x128xf32>
    %257 = arith.addf %241, %256 : vector<32x128xf32>
    %c1_89 = arith.constant 1 : index
    %c256_90 = arith.constant 256 : index
    %258 = vector.load %arg2[%c1_89, %c256_90] : memref<2x512xf32, #tpu.memory_space<vmem>>, vector<1x128xf32>
    %259 = vector.broadcast %258 : vector<1x128xf32> to vector<32x128xf32>
    %260 = arith.addf %257, %259 : vector<32x128xf32>
    %cst_91 = arith.constant 0.000000e+00 : f32
    %261 = vector.broadcast %cst_91 : f32 to vector<32x128xf32>
    %262 = arith.maximumf %260, %261 : vector<32x128xf32>
    %c512 = arith.constant 512 : index
    %c0_92 = arith.constant 0 : index
    %263 = vector.load %arg1[%c512, %c0_92] : memref<640x512xbf16, #tpu.memory_space<vmem>>, vector<128x512xbf16>
    %264 = arith.truncf %262 : vector<32x128xf32> to vector<32x128xbf16>
    %cst_93 = arith.constant dense<0.000000e+00> : vector<32x512xf32>
    %265 = tpu.matmul %264, %263, %cst_93 {dimension_numbers = #tpu.dot_dimension_numbers<[1], [0], [0], [1], [0, 0, 1, 1], [], []>} : vector<32x128xbf16>, vector<128x512xbf16>, vector<32x512xf32> -> vector<32x512xf32>
    %266 = arith.truncf %265 : vector<32x512xf32> to vector<32x512xbf16>
    %267 = tpu.iota {dimensions = array<i32: 0>} : vector<64x32xi32>
    %268 = tpu.iota {dimensions = array<i32: 1>} : vector<64x32xi32>
    %c2_i32_94 = arith.constant 2 : i32
    %269 = vector.broadcast %c2_i32_94 : i32 to vector<64x32xi32>
    %270 = arith.muli %269, %268 : vector<64x32xi32>
    %c1_i32_95 = arith.constant 1 : i32
    %271 = vector.broadcast %c1_i32_95 : i32 to vector<64x32xi32>
    %272 = arith.subi %270, %271 : vector<64x32xi32>
    %c0_i32_96 = arith.constant 0 : i32
    %273 = vector.broadcast %c0_i32_96 : i32 to vector<64x32xi32>
    %274 = arith.addi %272, %273 : vector<64x32xi32>
    %275 = arith.cmpi eq, %267, %274 : vector<64x32xi32>
    %cst_97 = arith.constant 1.000000e+00 : f32
    %cst_98 = arith.constant 0.000000e+00 : f32
    %276 = vector.broadcast %cst_97 : f32 to vector<64x32xf32>
    %277 = vector.broadcast %cst_98 : f32 to vector<64x32xf32>
    %278 = arith.select %275, %276, %277 : vector<64x32xi1>, vector<64x32xf32>
    %279 = arith.truncf %278 : vector<64x32xf32> to vector<64x32xbf16>
    %280 = vector.extract_strided_slice %266 {offsets = [0, 0], sizes = [32, 128], strides = [1, 1]} : vector<32x512xbf16> to vector<32x128xbf16>
    %cst_99 = arith.constant dense<0.000000e+00> : vector<64x128xf32>
    %281 = tpu.matmul %279, %280, %cst_99 {dimension_numbers = #tpu.dot_dimension_numbers<[1], [0], [0], [1], [0, 0, 1, 1], [], []>} : vector<64x32xbf16>, vector<32x128xbf16>, vector<64x128xf32> -> vector<64x128xf32>
    %282 = tpu.iota {dimensions = array<i32: 0>} : vector<64x32xi32>
    %283 = tpu.iota {dimensions = array<i32: 1>} : vector<64x32xi32>
    %c2_i32_100 = arith.constant 2 : i32
    %284 = vector.broadcast %c2_i32_100 : i32 to vector<64x32xi32>
    %285 = arith.muli %284, %283 : vector<64x32xi32>
    %c1_i32_101 = arith.constant 1 : i32
    %286 = vector.broadcast %c1_i32_101 : i32 to vector<64x32xi32>
    %287 = arith.subi %285, %286 : vector<64x32xi32>
    %c1_i32_102 = arith.constant 1 : i32
    %288 = vector.broadcast %c1_i32_102 : i32 to vector<64x32xi32>
    %289 = arith.addi %287, %288 : vector<64x32xi32>
    %290 = arith.cmpi eq, %282, %289 : vector<64x32xi32>
    %cst_103 = arith.constant 1.000000e+00 : f32
    %cst_104 = arith.constant 0.000000e+00 : f32
    %291 = vector.broadcast %cst_103 : f32 to vector<64x32xf32>
    %292 = vector.broadcast %cst_104 : f32 to vector<64x32xf32>
    %293 = arith.select %290, %291, %292 : vector<64x32xi1>, vector<64x32xf32>
    %294 = arith.truncf %293 : vector<64x32xf32> to vector<64x32xbf16>
    %295 = vector.extract_strided_slice %266 {offsets = [0, 128], sizes = [32, 128], strides = [1, 1]} : vector<32x512xbf16> to vector<32x128xbf16>
    %cst_105 = arith.constant dense<0.000000e+00> : vector<64x128xf32>
    %296 = tpu.matmul %294, %295, %cst_105 {dimension_numbers = #tpu.dot_dimension_numbers<[1], [0], [0], [1], [0, 0, 1, 1], [], []>} : vector<64x32xbf16>, vector<32x128xbf16>, vector<64x128xf32> -> vector<64x128xf32>
    %297 = arith.addf %281, %296 : vector<64x128xf32>
    %298 = tpu.iota {dimensions = array<i32: 0>} : vector<64x32xi32>
    %299 = tpu.iota {dimensions = array<i32: 1>} : vector<64x32xi32>
    %c2_i32_106 = arith.constant 2 : i32
    %300 = vector.broadcast %c2_i32_106 : i32 to vector<64x32xi32>
    %301 = arith.muli %300, %299 : vector<64x32xi32>
    %c1_i32_107 = arith.constant 1 : i32
    %302 = vector.broadcast %c1_i32_107 : i32 to vector<64x32xi32>
    %303 = arith.subi %301, %302 : vector<64x32xi32>
    %c2_i32_108 = arith.constant 2 : i32
    %304 = vector.broadcast %c2_i32_108 : i32 to vector<64x32xi32>
    %305 = arith.addi %303, %304 : vector<64x32xi32>
    %306 = arith.cmpi eq, %298, %305 : vector<64x32xi32>
    %cst_109 = arith.constant 1.000000e+00 : f32
    %cst_110 = arith.constant 0.000000e+00 : f32
    %307 = vector.broadcast %cst_109 : f32 to vector<64x32xf32>
    %308 = vector.broadcast %cst_110 : f32 to vector<64x32xf32>
    %309 = arith.select %306, %307, %308 : vector<64x32xi1>, vector<64x32xf32>
    %310 = arith.truncf %309 : vector<64x32xf32> to vector<64x32xbf16>
    %311 = vector.extract_strided_slice %266 {offsets = [0, 256], sizes = [32, 128], strides = [1, 1]} : vector<32x512xbf16> to vector<32x128xbf16>
    %cst_111 = arith.constant dense<0.000000e+00> : vector<64x128xf32>
    %312 = tpu.matmul %310, %311, %cst_111 {dimension_numbers = #tpu.dot_dimension_numbers<[1], [0], [0], [1], [0, 0, 1, 1], [], []>} : vector<64x32xbf16>, vector<32x128xbf16>, vector<64x128xf32> -> vector<64x128xf32>
    %313 = arith.addf %297, %312 : vector<64x128xf32>
    %314 = tpu.iota {dimensions = array<i32: 0>} : vector<64x32xi32>
    %315 = tpu.iota {dimensions = array<i32: 1>} : vector<64x32xi32>
    %c2_i32_112 = arith.constant 2 : i32
    %316 = vector.broadcast %c2_i32_112 : i32 to vector<64x32xi32>
    %317 = arith.muli %316, %315 : vector<64x32xi32>
    %c1_i32_113 = arith.constant 1 : i32
    %318 = vector.broadcast %c1_i32_113 : i32 to vector<64x32xi32>
    %319 = arith.subi %317, %318 : vector<64x32xi32>
    %c3_i32_114 = arith.constant 3 : i32
    %320 = vector.broadcast %c3_i32_114 : i32 to vector<64x32xi32>
    %321 = arith.addi %319, %320 : vector<64x32xi32>
    %322 = arith.cmpi eq, %314, %321 : vector<64x32xi32>
    %cst_115 = arith.constant 1.000000e+00 : f32
    %cst_116 = arith.constant 0.000000e+00 : f32
    %323 = vector.broadcast %cst_115 : f32 to vector<64x32xf32>
    %324 = vector.broadcast %cst_116 : f32 to vector<64x32xf32>
    %325 = arith.select %322, %323, %324 : vector<64x32xi1>, vector<64x32xf32>
    %326 = arith.truncf %325 : vector<64x32xf32> to vector<64x32xbf16>
    %327 = vector.extract_strided_slice %266 {offsets = [0, 384], sizes = [32, 128], strides = [1, 1]} : vector<32x512xbf16> to vector<32x128xbf16>
    %cst_117 = arith.constant dense<0.000000e+00> : vector<64x128xf32>
    %328 = tpu.matmul %326, %327, %cst_117 {dimension_numbers = #tpu.dot_dimension_numbers<[1], [0], [0], [1], [0, 0, 1, 1], [], []>} : vector<64x32xbf16>, vector<32x128xbf16>, vector<64x128xf32> -> vector<64x128xf32>
    %329 = arith.addf %313, %328 : vector<64x128xf32>
    %c1_118 = arith.constant 1 : index
    %c384_119 = arith.constant 384 : index
    %330 = vector.load %arg2[%c1_118, %c384_119] : memref<2x512xf32, #tpu.memory_space<vmem>>, vector<1x128xf32>
    %331 = vector.broadcast %330 : vector<1x128xf32> to vector<64x128xf32>
    %332 = arith.addf %329, %331 : vector<64x128xf32>
    %333 = vector.extract_strided_slice %332 {offsets = [0, 0], sizes = [64, 64], strides = [1, 1]} : vector<64x128xf32> to vector<64x64xf32>
    %cst_120 = arith.constant 0.000000e+00 : f32
    %334 = vector.broadcast %cst_120 : f32 to vector<64x64xf32>
    %335 = arith.subf %334, %333 : vector<64x64xf32>
    %336 = math.exp %335 : vector<64x64xf32>
    %cst_121 = arith.constant 1.000000e+00 : f32
    %337 = vector.broadcast %cst_121 : f32 to vector<64x64xf32>
    %338 = arith.addf %337, %336 : vector<64x64xf32>
    %339 = tpu.reciprocal %338 {approx = true} : vector<64x64xf32> -> vector<64x64xf32>
    %c0_122 = arith.constant 0 : index
    %c0_123 = arith.constant 0 : index
    %340 = vector.load %arg3[%c0_122, %c0_123] : memref<64x64xf32, #tpu.memory_space<vmem>>, vector<64x64xf32>
    tpu.vector_store %arg3[%c0_122, %c0_123], %339 {strides = array<i32>} : memref<64x64xf32, #tpu.memory_space<vmem>>, vector<64x64xf32>,
    return
  }
}

</mosaic_0001>

<llo_original>
// kernel: decoder_forward.1
$region0: #{decoder_forward.1}
  #allocation0 [shape = 'u32[]', space=smem, size = 0x4, offset = 0x4, fixed_abs, tag = 'smem constant byte address 0x4 - core index']
  #allocation1 [shape = 'u32[144,128]{1,0:T(1,128)}', space=vmem, size = 0x12000, scoped, tag = 'internal scratch']
  %s0 = inlined_call_operand.vmem [shape: f32[1,32], index: 0, kind: input, shape index: {}]
  %s1 = inlined_call_operand.hbm [shape: bf16[640,512], index: 1, kind: input, shape index: {}]
  %s2 = inlined_call_operand.hbm [shape: f32[2,512], index: 2, kind: input, shape index: {}]
  %s3 = inlined_call_operand.hbm [shape: f32[64,64], index: 3, kind: output, shape index: {}]
  %s4 = sld [smem:[#allocation0]]
  $region30: #{decoder_forward.1} parent=0
    _
  %s6 = ssub.s32 1, %s4
  %s7 = scalar_select 0, %s6, %s4
  $region1: #{decoder_forward.1} parent=0
    #allocation2 [shape = 'u8[655360]{0}', space=vmem, size = 0xa0000, scoped, tag = 'input window, operand 1, single buffered']
    #allocation3 [shape = 's32[1]{0}', space=sflag, size = 0x4, scoped, tag = 'scoped memory for decoder_forward.1']
    #allocation4 [shape = 's32[1]{0}', space=sflag, size = 0x4, scoped, tag = 'scoped memory for decoder_forward.1']
    #allocation5 [shape = 'u8[4096]{0}', space=vmem, size = 0x1000, scoped, tag = 'input window, operand 2, single buffered']
    #allocation6 [shape = 's32[1]{0}', space=sflag, size = 0x4, scoped, tag = 'scoped memory for decoder_forward.1']
    #allocation7 [shape = 'u8[32768]{0}', space=vmem, size = 0x8000, scoped, tag = 'output window, operand 0, single buffered']
    %8 = vsyncpa [#allocation3], 0
    %9 = vsyncpa [#allocation6], 0
    %10 = vsyncpa [#allocation4], 0
    // Predicated region
    $region2: #{decoder_forward.1} parent=1 // pred_check
      _
    $region3: #{decoder_forward.1} parent=1 // pred_check_branch
      %12 = sbr.rel (0) target = $region5
    $region4: #{decoder_forward.1} parent=1 // pred_region
      _
    $region5: #{decoder_forward.1} parent=1 // pred_fallthru
      _
    // Predicated region
    $region6: #{decoder_forward.1} parent=1 // pred_check
      _
    $region7: #{decoder_forward.1} parent=1 // pred_check_branch
      %14 = sbr.rel (0) target = $region9
    $region8: #{decoder_forward.1} parent=1 // pred_region
      %s16 = ssub.s32 20480, 20480
      %17 = vsyncadd [#allocation3], %s16
      %s18 = sshll.u32 [#allocation2], 4
      %s19 = int_to_ptr.vmem [resolvable:$true] %s18
      %24 = dma.hbm_to_vmem [thread:$0]  %s1, 20480, %s19, [#allocation3], 256, 256, 16
    $region9: #{decoder_forward.1} parent=1 // pred_fallthru
      _
    // Predicated region
    $region10: #{decoder_forward.1} parent=1 // pred_check
      _
    $region11: #{decoder_forward.1} parent=1 // pred_check_branch
      %26 = sbr.rel (0) target = $region13
    $region12: #{decoder_forward.1} parent=1 // pred_region
      %s28 = ssub.s32 128, 128
      %29 = vsyncadd [#allocation6], %s28
      %s31 = sshll.u32 [#allocation5], 4
      %s32 = int_to_ptr.vmem [resolvable:$true] %s31
      %34 = dma.hbm_to_vmem [thread:$0]  %s2, 128, %s32, [#allocation6]
    $region13: #{decoder_forward.1} parent=1 // pred_fallthru
      _
    // Predicated region
    $region14: #{decoder_forward.1} parent=1 // pred_check
      _
    $region15: #{decoder_forward.1} parent=1 // pred_check_branch
      %36 = sbr.rel (0) target = $region17
    $region16: #{decoder_forward.1} parent=1 // pred_region
      %37 = dma.done [#allocation3], 20480
    $region17: #{decoder_forward.1} parent=1 // pred_fallthru
      _
    // Predicated region
    $region18: #{decoder_forward.1} parent=1 // pred_check
      _
    $region19: #{decoder_forward.1} parent=1 // pred_check_branch
      %39 = sbr.rel (0) target = $region21
    $region20: #{decoder_forward.1} parent=1 // pred_region
      %40 = dma.done [#allocation6], 128
    $region21: #{decoder_forward.1} parent=1 // pred_fallthru
      _
    %v42 = vld [vmem:[%s0] sm:$0x1]
    %v43 = vpack.c.bf16 %v42, %v42
    %v44 = vld [vmem:[#allocation2] sm:$0xff]
    %v45 = vld [vmem:[#allocation2 + $0x8] sm:$0xff]
    %v46 = vld [vmem:[#allocation2 + $0x10] sm:$0xff]
    %v47 = vld [vmem:[#allocation2 + $0x18] sm:$0xff]
    %v48 = vld [vmem:[#allocation2 + $0x20] sm:$0xff]
    %v49 = vld [vmem:[#allocation2 + $0x28] sm:$0xff]
    %v50 = vld [vmem:[#allocation2 + $0x30] sm:$0xff]
    %v51 = vld [vmem:[#allocation2 + $0x38] sm:$0xff]
    %v52 = vld [vmem:[#allocation5] ss:$2 sm:$0xf]
    %v61 = vunpack.c.l.b16 %v44
    %v62 = vunpack.c.h.b16 %v44
    %v63 = vunpack.c.l.b16 %v45
    %v64 = vunpack.c.h.b16 %v45
    %v65 = vunpack.c.l.b16 %v46
    %v66 = vunpack.c.h.b16 %v46
    %v67 = vunpack.c.l.b16 %v47
    %v68 = vunpack.c.h.b16 %v47
    %v69 = vunpack.c.l.b16 %v48
    %v70 = vunpack.c.h.b16 %v48
    %v71 = vunpack.c.l.b16 %v49
    %v72 = vunpack.c.h.b16 %v49
    %v73 = vunpack.c.l.b16 %v50
    %v74 = vunpack.c.h.b16 %v50
    %v75 = vunpack.c.l.b16 %v51
    %v76 = vunpack.c.h.b16 %v51
    %v77 = vpack.c.b16 %v65, %v61
    %v78 = vpack.c.b16 %v66, %v62
    %v79 = vpack.c.b16 %v67, %v63
    %v80 = vpack.c.b16 %v68, %v64
    %v81 = vpack.c.b16 %v73, %v69
    %v82 = vpack.c.b16 %v74, %v70
    %v83 = vpack.c.b16 %v75, %v71
    %v84 = vpack.c.b16 %v76, %v72
    %v94 = vlaneseq
    %v95 = vshrl.u32 %v94, 7
    %v96 = vsub.s32 0, %v95
    %v97 = vrot.slane %v52, %v96
    %v98 = vlaneseq
    %v99 = vshrl.u32 %v98, 7
    %v100 = vsub.s32 1, %v99
    %v101 = vrot.slane %v52, %v100
    %v102 = vlaneseq
    %v103 = vshrl.u32 %v102, 7
    %v104 = vsub.s32 2, %v103
    %v105 = vrot.slane %v52, %v104
    %v106 = vlaneseq
    %v107 = vshrl.u32 %v106, 7
    %v108 = vsub.s32 3, %v107
    %v109 = vrot.slane %v52, %v108
    %vm114 = vcmask 261120
    %v116 = vsel %vm114, %v43, 0
    %118 = vmatprep.subr.bf16.mxu0 %v78
    %119 = vmatpush1.bf16.msra.mxu0 %v77
    %120 = vmatprep.subr.bf16.mxu0 %v82
    %121 = vmatpush1.bf16.msra.mxu0 %v81
    %122 = vmatprep.subr.bf16.mxu0 0
    %123 = vmatpush1.bf16.msra.mxu0 0
    %124 = vmatprep.subr.bf16.mxu0 0
    %125 = vmatpush1.bf16.msra.mxu0 0
    %126 = vmatprep.subr.bf16.mxu0 0
    %127 = vmatpush1.bf16.msra.mxu0 0
    %128 = vmatprep.subr.bf16.mxu0 0
    %129 = vmatpush1.bf16.msra.mxu0 0
    %130 = vmatprep.subr.bf16.mxu0 0
    %131 = vmatpush1.bf16.msra.mxu0 0
    %132 = vmatprep.subr.bf16.mxu0 0
    %133 = vmatpush1.bf16.msra.mxu0 0
    %134 = vmatprep.subr.bf16.mxu0 0
    %135 = vmatpush1.bf16.msra.mxu0 0
    %136 = vmatprep.subr.bf16.mxu0 0
    %137 = vmatpush1.bf16.msra.mxu0 0
    %138 = vmatprep.subr.bf16.mxu0 0
    %139 = vmatpush1.bf16.msra.mxu0 0
    %140 = vmatprep.subr.bf16.mxu0 0
    %141 = vmatpush1.bf16.msra.mxu0 0
    %142 = vmatprep.subr.bf16.mxu0 0
    %143 = vmatpush1.bf16.msra.mxu0 0
    %144 = vmatprep.subr.bf16.mxu0 0
    %145 = vmatpush1.bf16.msra.mxu0 0
    %146 = vmatprep.subr.bf16.mxu0 0
    %147 = vmatpush1.bf16.msra.mxu0 0
    %148 = vmatprep.subr.bf16.mxu0 0
    %149 = vmatpush1.bf16.msra.mxu0 0
    %150 = vmatprep.mubr.bf16.mxu0 0
    %151 = vmatmul.mubr.bf16.gmra.mrb[0].mxu0 %v116
    %v152 = vpop.f32.mrb[0].mxu0
    %v153 = vadd.f32 %v97, %v152
    %v154 = vpop.f32.mrb[0].mxu0
    %v155 = vadd.f32 %v101, %v154
    %v156 = vpop.f32.mrb[0].mxu0
    %v157 = vpop.f32.mrb[0].mxu0
    %158 = vdwg.mxu0
    %159 = vmatprep.subr.bf16.mxu0 %v80
    %160 = vmatpush1.bf16.msra.mxu0 %v79
    %161 = vmatprep.subr.bf16.mxu0 %v84
    %162 = vmatpush1.bf16.msra.mxu0 %v83
    %163 = vmatprep.subr.bf16.mxu0 0
    %164 = vmatpush1.bf16.msra.mxu0 0
    %165 = vmatprep.subr.bf16.mxu0 0
    %166 = vmatpush1.bf16.msra.mxu0 0
    %167 = vmatprep.subr.bf16.mxu0 0
    %168 = vmatpush1.bf16.msra.mxu0 0
    %169 = vmatprep.subr.bf16.mxu0 0
    %170 = vmatpush1.bf16.msra.mxu0 0
    %171 = vmatprep.subr.bf16.mxu0 0
    %172 = vmatpush1.bf16.msra.mxu0 0
    %173 = vmatprep.subr.bf16.mxu0 0
    %174 = vmatpush1.bf16.msra.mxu0 0
    %175 = vmatprep.subr.bf16.mxu0 0
    %176 = vmatpush1.bf16.msra.mxu0 0
    %177 = vmatprep.subr.bf16.mxu0 0
    %178 = vmatpush1.bf16.msra.mxu0 0
    %179 = vmatprep.subr.bf16.mxu0 0
    %180 = vmatpush1.bf16.msra.mxu0 0
    %181 = vmatprep.subr.bf16.mxu0 0
    %182 = vmatpush1.bf16.msra.mxu0 0
    %183 = vmatprep.subr.bf16.mxu0 0
    %184 = vmatpush1.bf16.msra.mxu0 0
    %185 = vmatprep.subr.bf16.mxu0 0
    %186 = vmatpush1.bf16.msra.mxu0 0
    %187 = vmatprep.subr.bf16.mxu0 0
    %188 = vmatpush1.bf16.msra.mxu0 0
    %189 = vmatprep.subr.bf16.mxu0 0
    %190 = vmatpush1.bf16.msra.mxu0 0
    %191 = vmatprep.mubr.bf16.mxu0 0
    %192 = vmatmul.mubr.bf16.gmra.mrb[0].mxu0 %v116
    %v193 = vpop.f32.mrb[0].mxu0
    %v194 = vadd.f32 %v105, %v193
    %v195 = vpop.f32.mrb[0].mxu0
    %v196 = vadd.f32 %v109, %v195
    %v197 = vpop.f32.mrb[0].mxu0
    %v198 = vpop.f32.mrb[0].mxu0
    %199 = vdwg.mxu0
    %v200 = vlaneseq
    %v201 = vshrl.u32 %v200, 7
    %vm202 = vcmp.eq.s32.totalorder %v201, 0
    %v203 = vsel %vm202, 1, 0
    %v204 = vcvt.s32.f32 %v203
    %v205 = vlaneseq
    %v206 = vshrl.u32 %v205, 7
    %v207 = vsub.s32 0, %v206
    %v208 = vrot.slane %v153, %v207
    %v209 = vmul.f32 %v204, %v208
    %vm210 = vcmp.eq.s32.totalorder %v201, 1
    %v211 = vsel %vm210, 1, 0
    %v212 = vcvt.s32.f32 %v211
    %v213 = vlaneseq
    %v214 = vshrl.u32 %v213, 7
    %v215 = vsub.s32 0, %v214
    %v216 = vrot.slane %v155, %v215
    %v217 = vmul.f32 %v212, %v216
    %v218 = vadd.f32 %v209, %v217
    %vm219 = vcmp.eq.s32.totalorder %v201, 2
    %v220 = vsel %vm219, 1, 0
    %v221 = vcvt.s32.f32 %v220
    %v222 = vlaneseq
    %v223 = vshrl.u32 %v222, 7
    %v224 = vsub.s32 0, %v223
    %v225 = vrot.slane %v194, %v224
    %v226 = vmul.f32 %v221, %v225
    %v227 = vadd.f32 %v218, %v226
    %vm228 = vcmp.eq.s32.totalorder %v201, 3
    %v229 = vsel %vm228, 1, 0
    %v230 = vcvt.s32.f32 %v229
    %v231 = vlaneseq
    %v232 = vshrl.u32 %v231, 7
    %v233 = vsub.s32 0, %v232
    %v234 = vrot.slane %v196, %v233
    %v235 = vmul.f32 %v230, %v234
    %v236 = vadd.f32 %v227, %v235
    %v237 = vmax.f32 %v236, 0.0
    %v238 = vld [vmem:[#allocation2 + $0x100] sm:$0xff]
    %v239 = vld [vmem:[#allocation2 + $0x108] sm:$0xff]
    %v240 = vld [vmem:[#allocation2 + $0x110] sm:$0xff]
    %v241 = vld [vmem:[#allocation2 + $0x118] sm:$0xff]
    %v242 = vld [vmem:[#allocation2 + $0x120] sm:$0xff]
    %v243 = vld [vmem:[#allocation2 + $0x128] sm:$0xff]
    %v244 = vld [vmem:[#allocation2 + $0x130] sm:$0xff]
    %v245 = vld [vmem:[#allocation2 + $0x138] sm:$0xff]
    %v246 = vld [vmem:[#allocation2 + $0x140] sm:$0xff]
    %v247 = vld [vmem:[#allocation2 + $0x148] sm:$0xff]
    %v248 = vld [vmem:[#allocation2 + $0x150] sm:$0xff]
    %v249 = vld [vmem:[#allocation2 + $0x158] sm:$0xff]
    %v250 = vld [vmem:[#allocation2 + $0x160] sm:$0xff]
    %v251 = vld [vmem:[#allocation2 + $0x168] sm:$0xff]
    %v252 = vld [vmem:[#allocation2 + $0x170] sm:$0xff]
    %v253 = vld [vmem:[#allocation2 + $0x178] sm:$0xff]
    %v254 = vld [vmem:[#allocation2 + $0x180] sm:$0xff]
    %v255 = vld [vmem:[#allocation2 + $0x188] sm:$0xff]
    %v256 = vld [vmem:[#allocation2 + $0x190] sm:$0xff]
    %v257 = vld [vmem:[#allocation2 + $0x198] sm:$0xff]
    %v258 = vld [vmem:[#allocation2 + $0x1a0] sm:$0xff]
    %v259 = vld [vmem:[#allocation2 + $0x1a8] sm:$0xff]
    %v260 = vld [vmem:[#allocation2 + $0x1b0] sm:$0xff]
    %v261 = vld [vmem:[#allocation2 + $0x1b8] sm:$0xff]
    %v262 = vld [vmem:[#allocation2 + $0x1c0] sm:$0xff]
    %v263 = vld [vmem:[#allocation2 + $0x1c8] sm:$0xff]
    %v264 = vld [vmem:[#allocation2 + $0x1d0] sm:$0xff]
    %v265 = vld [vmem:[#allocation2 + $0x1d8] sm:$0xff]
    %v266 = vld [vmem:[#allocation2 + $0x1e0] sm:$0xff]
    %v267 = vld [vmem:[#allocation2 + $0x1e8] sm:$0xff]
    %v268 = vld [vmem:[#allocation2 + $0x1f0] sm:$0xff]
    %v269 = vld [vmem:[#allocation2 + $0x1f8] sm:$0xff]
    %v270 = vpack.c.bf16 %v237, %v237
    %v303 = vunpack.c.l.b16 %v238
    %v304 = vunpack.c.h.b16 %v238
    %v305 = vunpack.c.l.b16 %v239
    %v306 = vunpack.c.h.b16 %v239
    %v307 = vunpack.c.l.b16 %v240
    %v308 = vunpack.c.h.b16 %v240
    %v309 = vunpack.c.l.b16 %v241
    %v310 = vunpack.c.h.b16 %v241
    %v311 = vunpack.c.l.b16 %v242
    %v312 = vunpack.c.h.b16 %v242
    %v313 = vunpack.c.l.b16 %v243
    %v314 = vunpack.c.h.b16 %v243
    %v315 = vunpack.c.l.b16 %v244
    %v316 = vunpack.c.h.b16 %v244
    %v317 = vunpack.c.l.b16 %v245
    %v318 = vunpack.c.h.b16 %v245
    %v319 = vunpack.c.l.b16 %v246
    %v320 = vunpack.c.h.b16 %v246
    %v321 = vunpack.c.l.b16 %v247
    %v322 = vunpack.c.h.b16 %v247
    %v323 = vunpack.c.l.b16 %v248
    %v324 = vunpack.c.h.b16 %v248
    %v325 = vunpack.c.l.b16 %v249
    %v326 = vunpack.c.h.b16 %v249
    %v327 = vunpack.c.l.b16 %v250
    %v328 = vunpack.c.h.b16 %v250
    %v329 = vunpack.c.l.b16 %v251
    %v330 = vunpack.c.h.b16 %v251
    %v331 = vunpack.c.l.b16 %v252
    %v332 = vunpack.c.h.b16 %v252
    %v333 = vunpack.c.l.b16 %v253
    %v334 = vunpack.c.h.b16 %v253
    %v335 = vunpack.c.l.b16 %v254
    %v336 = vunpack.c.h.b16 %v254
    %v337 = vunpack.c.l.b16 %v255
    %v338 = vunpack.c.h.b16 %v255
    %v339 = vunpack.c.l.b16 %v256
    %v340 = vunpack.c.h.b16 %v256
    %v341 = vunpack.c.l.b16 %v257
    %v342 = vunpack.c.h.b16 %v257
    %v343 = vunpack.c.l.b16 %v258
    %v344 = vunpack.c.h.b16 %v258
    %v345 = vunpack.c.l.b16 %v259
    %v346 = vunpack.c.h.b16 %v259
    %v347 = vunpack.c.l.b16 %v260
    %v348 = vunpack.c.h.b16 %v260
    %v349 = vunpack.c.l.b16 %v261
    %v350 = vunpack.c.h.b16 %v261
    %v351 = vunpack.c.l.b16 %v262
    %v352 = vunpack.c.h.b16 %v262
    %v353 = vunpack.c.l.b16 %v263
    %v354 = vunpack.c.h.b16 %v263
    %v355 = vunpack.c.l.b16 %v264
    %v356 = vunpack.c.h.b16 %v264
    %v357 = vunpack.c.l.b16 %v265
    %v358 = vunpack.c.h.b16 %v265
    %v359 = vunpack.c.l.b16 %v266
    %v360 = vunpack.c.h.b16 %v266
    %v361 = vunpack.c.l.b16 %v267
    %v362 = vunpack.c.h.b16 %v267
    %v363 = vunpack.c.l.b16 %v268
    %v364 = vunpack.c.h.b16 %v268
    %v365 = vunpack.c.l.b16 %v269
    %v366 = vunpack.c.h.b16 %v269
    %v367 = vpack.c.b16 %v307, %v303
    %v368 = vpack.c.b16 %v308, %v304
    %v369 = vpack.c.b16 %v309, %v305
    %v370 = vpack.c.b16 %v310, %v306
    %v371 = vpack.c.b16 %v315, %v311
    %v372 = vpack.c.b16 %v316, %v312
    %v373 = vpack.c.b16 %v317, %v313
    %v374 = vpack.c.b16 %v318, %v314
    %v375 = vpack.c.b16 %v323, %v319
    %v376 = vpack.c.b16 %v324, %v320
    %v377 = vpack.c.b16 %v325, %v321
    %v378 = vpack.c.b16 %v326, %v322
    %v379 = vpack.c.b16 %v331, %v327
    %v380 = vpack.c.b16 %v332, %v328
    %v381 = vpack.c.b16 %v333, %v329
    %v382 = vpack.c.b16 %v334, %v330
    %v383 = vpack.c.b16 %v339, %v335
    %v384 = vpack.c.b16 %v340, %v336
    %v385 = vpack.c.b16 %v341, %v337
    %v386 = vpack.c.b16 %v342, %v338
    %v387 = vpack.c.b16 %v347, %v343
    %v388 = vpack.c.b16 %v348, %v344
    %v389 = vpack.c.b16 %v349, %v345
    %v390 = vpack.c.b16 %v350, %v346
    %v391 = vpack.c.b16 %v355, %v351
    %v392 = vpack.c.b16 %v356, %v352
    %v393 = vpack.c.b16 %v357, %v353
    %v394 = vpack.c.b16 %v358, %v354
    %v395 = vpack.c.b16 %v363, %v359
    %v396 = vpack.c.b16 %v364, %v360
    %v397 = vpack.c.b16 %v365, %v361
    %v398 = vpack.c.b16 %v366, %v362
    %431 = vmatprep.subr.bf16.mxu0 %v368
    %432 = vmatpush1.bf16.msra.mxu0 %v367
    %433 = vmatprep.subr.bf16.mxu0 %v372
    %434 = vmatpush1.bf16.msra.mxu0 %v371
    %435 = vmatprep.subr.bf16.mxu0 %v376
    %436 = vmatpush1.bf16.msra.mxu0 %v375
    %437 = vmatprep.subr.bf16.mxu0 %v380
    %438 = vmatpush1.bf16.msra.mxu0 %v379
    %439 = vmatprep.subr.bf16.mxu0 %v384
    %440 = vmatpush1.bf16.msra.mxu0 %v383
    %441 = vmatprep.subr.bf16.mxu0 %v388
    %442 = vmatpush1.bf16.msra.mxu0 %v387
    %443 = vmatprep.subr.bf16.mxu0 %v392
    %444 = vmatpush1.bf16.msra.mxu0 %v391
    %445 = vmatprep.subr.bf16.mxu0 %v396
    %446 = vmatpush1.bf16.msra.mxu0 %v395
    %447 = vmatprep.subr.bf16.mxu0 0
    %448 = vmatpush1.bf16.msra.mxu0 0
    %449 = vmatprep.subr.bf16.mxu0 0
    %450 = vmatpush1.bf16.msra.mxu0 0
    %451 = vmatprep.subr.bf16.mxu0 0
    %452 = vmatpush1.bf16.msra.mxu0 0
    %453 = vmatprep.subr.bf16.mxu0 0
    %454 = vmatpush1.bf16.msra.mxu0 0
    %455 = vmatprep.subr.bf16.mxu0 0
    %456 = vmatpush1.bf16.msra.mxu0 0
    %457 = vmatprep.subr.bf16.mxu0 0
    %458 = vmatpush1.bf16.msra.mxu0 0
    %459 = vmatprep.subr.bf16.mxu0 0
    %460 = vmatpush1.bf16.msra.mxu0 0
    %461 = vmatprep.subr.bf16.mxu0 0
    %462 = vmatpush1.bf16.msra.mxu0 0
    %463 = vmatprep.mubr.bf16.mxu0 0
    %464 = vmatmul.mubr.bf16.gmra.mrb[0].mxu0 %v270
    %v465 = vpop.f32.mrb[0].mxu0
    %v466 = vadd.f32 0.0, %v465
    %v467 = vpop.f32.mrb[0].mxu0
    %v468 = vadd.f32 0.0, %v467
    %v469 = vpop.f32.mrb[0].mxu0
    %v470 = vpop.f32.mrb[0].mxu0
    %471 = vdwg.mxu0
    %472 = vmatprep.subr.bf16.mxu0 %v370
    %473 = vmatpush1.bf16.msra.mxu0 %v369
    %474 = vmatprep.subr.bf16.mxu0 %v374
    %475 = vmatpush1.bf16.msra.mxu0 %v373
    %476 = vmatprep.subr.bf16.mxu0 %v378
    %477 = vmatpush1.bf16.msra.mxu0 %v377
    %478 = vmatprep.subr.bf16.mxu0 %v382
    %479 = vmatpush1.bf16.msra.mxu0 %v381
    %480 = vmatprep.subr.bf16.mxu0 %v386
    %481 = vmatpush1.bf16.msra.mxu0 %v385
    %482 = vmatprep.subr.bf16.mxu0 %v390
    %483 = vmatpush1.bf16.msra.mxu0 %v389
    %484 = vmatprep.subr.bf16.mxu0 %v394
    %485 = vmatpush1.bf16.msra.mxu0 %v393
    %486 = vmatprep.subr.bf16.mxu0 %v398
    %487 = vmatpush1.bf16.msra.mxu0 %v397
    %488 = vmatprep.subr.bf16.mxu0 0
    %489 = vmatpush1.bf16.msra.mxu0 0
    %490 = vmatprep.subr.bf16.mxu0 0
    %491 = vmatpush1.bf16.msra.mxu0 0
    %492 = vmatprep.subr.bf16.mxu0 0
    %493 = vmatpush1.bf16.msra.mxu0 0
    %494 = vmatprep.subr.bf16.mxu0 0
    %495 = vmatpush1.bf16.msra.mxu0 0
    %496 = vmatprep.subr.bf16.mxu0 0
    %497 = vmatpush1.bf16.msra.mxu0 0
    %498 = vmatprep.subr.bf16.mxu0 0
    %499 = vmatpush1.bf16.msra.mxu0 0
    %500 = vmatprep.subr.bf16.mxu0 0
    %501 = vmatpush1.bf16.msra.mxu0 0
    %502 = vmatprep.subr.bf16.mxu0 0
    %503 = vmatpush1.bf16.msra.mxu0 0
    %504 = vmatprep.mubr.bf16.mxu0 0
    %505 = vmatmul.mubr.bf16.gmra.mrb[0].mxu0 %v270
    %v506 = vpop.f32.mrb[0].mxu0
    %v507 = vadd.f32 0.0, %v506
    %v508 = vpop.f32.mrb[0].mxu0
    %v509 = vadd.f32 0.0, %v508
    %v510 = vpop.f32.mrb[0].mxu0
    %v511 = vpop.f32.mrb[0].mxu0
    %512 = vdwg.mxu0
    %v513 = vpack.c.bf16 %v466, %v466
    %v514 = vpack.c.bf16 %v468, %v468
    %v515 = vpack.c.bf16 %v507, %v507
    %v516 = vpack.c.bf16 %v509, %v509
    %v517 = vlaneseq
    %v518 = vand.u32 %v517, 127
    %v519 = vmul.u32 %v518, 2
    %v520 = vsub.s32 %v519, 1
    %vm521 = vcmp.eq.s32.totalorder %v201, %v520
    %v522 = vsel %vm521, 1.0, 0.0
    %v523 = vpack.c.bf16 %v522, %v522
    %vm524 = vcmp.eq.s32.totalorder %v201, %v519
    %v525 = vsel %vm524, 1.0, 0.0
    %v526 = vpack.c.bf16 %v525, %v525
    %vm527 = vcmask 31744
    %v529 = vsel %vm527, %v526, 0
    %vm531 = vcmask 1041408
    %v533 = vsel %vm531, %v514, 0
    %535 = vmatprep.subr.bf16.mxu0 0
    %536 = vmatpush1.bf16.msra.mxu0 %v533
    %537 = vmatprep.subr.bf16.mxu0 0
    %538 = vmatpush1.bf16.msra.mxu0 0
    %539 = vmatprep.subr.bf16.mxu0 0
    %540 = vmatpush1.bf16.msra.mxu0 0
    %541 = vmatprep.subr.bf16.mxu0 0
    %542 = vmatpush1.bf16.msra.mxu0 0
    %543 = vmatprep.subr.bf16.mxu0 0
    %544 = vmatpush1.bf16.msra.mxu0 0
    %545 = vmatprep.subr.bf16.mxu0 0
    %546 = vmatpush1.bf16.msra.mxu0 0
    %547 = vmatprep.subr.bf16.mxu0 0
    %548 = vmatpush1.bf16.msra.mxu0 0
    %549 = vmatprep.subr.bf16.mxu0 0
    %550 = vmatpush1.bf16.msra.mxu0 0
    %551 = vmatprep.subr.bf16.mxu0 0
    %552 = vmatpush1.bf16.msra.mxu0 0
    %553 = vmatprep.subr.bf16.mxu0 0
    %554 = vmatpush1.bf16.msra.mxu0 0
    %555 = vmatprep.subr.bf16.mxu0 0
    %556 = vmatpush1.bf16.msra.mxu0 0
    %557 = vmatprep.subr.bf16.mxu0 0
    %558 = vmatpush1.bf16.msra.mxu0 0
    %559 = vmatprep.subr.bf16.mxu0 0
    %560 = vmatpush1.bf16.msra.mxu0 0
    %561 = vmatprep.subr.bf16.mxu0 0
    %562 = vmatpush1.bf16.msra.mxu0 0
    %563 = vmatprep.subr.bf16.mxu0 0
    %564 = vmatpush1.bf16.msra.mxu0 0
    %565 = vmatprep.subr.bf16.mxu0 0
    %566 = vmatpush1.bf16.msra.mxu0 0
    %567 = vmatprep.mubr.bf16.mxu0 0
    %568 = vmatmul.mubr.bf16.gmra.mrb[0].mxu0 %v529
    %v569 = vpop.f32.mrb[0].mxu0
    %v570 = vadd.f32 0.0, %v569
    %v571 = vpop.f32.mrb[0].mxu0
    %v572 = vpop.f32.mrb[0].mxu0
    %v573 = vpop.f32.mrb[0].mxu0
    %574 = vdwg.mxu0
    %v576 = vsel %vm527, %v523, 0
    %v579 = vsel %vm531, %v513, 0
    %581 = vmatprep.subr.bf16.mxu0 0
    %582 = vmatpush1.bf16.msra.mxu0 %v579
    %583 = vmatprep.subr.bf16.mxu0 0
    %584 = vmatpush1.bf16.msra.mxu0 0
    %585 = vmatprep.subr.bf16.mxu0 0
    %586 = vmatpush1.bf16.msra.mxu0 0
    %587 = vmatprep.subr.bf16.mxu0 0
    %588 = vmatpush1.bf16.msra.mxu0 0
    %589 = vmatprep.subr.bf16.mxu0 0
    %590 = vmatpush1.bf16.msra.mxu0 0
    %591 = vmatprep.subr.bf16.mxu0 0
    %592 = vmatpush1.bf16.msra.mxu0 0
    %593 = vmatprep.subr.bf16.mxu0 0
    %594 = vmatpush1.bf16.msra.mxu0 0
    %595 = vmatprep.subr.bf16.mxu0 0
    %596 = vmatpush1.bf16.msra.mxu0 0
    %597 = vmatprep.subr.bf16.mxu0 0
    %598 = vmatpush1.bf16.msra.mxu0 0
    %599 = vmatprep.subr.bf16.mxu0 0
    %600 = vmatpush1.bf16.msra.mxu0 0
    %601 = vmatprep.subr.bf16.mxu0 0
    %602 = vmatpush1.bf16.msra.mxu0 0
    %603 = vmatprep.subr.bf16.mxu0 0
    %604 = vmatpush1.bf16.msra.mxu0 0
    %605 = vmatprep.subr.bf16.mxu0 0
    %606 = vmatpush1.bf16.msra.mxu0 0
    %607 = vmatprep.subr.bf16.mxu0 0
    %608 = vmatpush1.bf16.msra.mxu0 0
    %609 = vmatprep.subr.bf16.mxu0 0
    %610 = vmatpush1.bf16.msra.mxu0 0
    %611 = vmatprep.subr.bf16.mxu0 0
    %612 = vmatpush1.bf16.msra.mxu0 0
    %613 = vmatprep.mubr.bf16.mxu0 0
    %614 = vmatmul.mubr.bf16.gmra.mrb[0].mxu0 %v576
    %v615 = vpop.f32.mrb[0].mxu0
    %v616 = vadd.f32 %v570, %v615
    %v617 = vpop.f32.mrb[0].mxu0
    %v618 = vpop.f32.mrb[0].mxu0
    %v619 = vpop.f32.mrb[0].mxu0
    %620 = vdwg.mxu0
    %v621 = vadd.s32 %v520, 2
    %vm622 = vcmp.eq.s32.totalorder %v201, %v621
    %v623 = vsel %vm622, 1.0, 0.0
    %v624 = vpack.c.bf16 %v623, %v623
    %v626 = vsel %vm527, %v624, 0
    %v629 = vsel %vm531, %v515, 0
    %631 = vmatprep.subr.bf16.mxu0 0
    %632 = vmatpush1.bf16.msra.mxu0 %v629
    %633 = vmatprep.subr.bf16.mxu0 0
    %634 = vmatpush1.bf16.msra.mxu0 0
    %635 = vmatprep.subr.bf16.mxu0 0
    %636 = vmatpush1.bf16.msra.mxu0 0
    %637 = vmatprep.subr.bf16.mxu0 0
    %638 = vmatpush1.bf16.msra.mxu0 0
    %639 = vmatprep.subr.bf16.mxu0 0
    %640 = vmatpush1.bf16.msra.mxu0 0
    %641 = vmatprep.subr.bf16.mxu0 0
    %642 = vmatpush1.bf16.msra.mxu0 0
    %643 = vmatprep.subr.bf16.mxu0 0
    %644 = vmatpush1.bf16.msra.mxu0 0
    %645 = vmatprep.subr.bf16.mxu0 0
    %646 = vmatpush1.bf16.msra.mxu0 0
    %647 = vmatprep.subr.bf16.mxu0 0
    %648 = vmatpush1.bf16.msra.mxu0 0
    %649 = vmatprep.subr.bf16.mxu0 0
    %650 = vmatpush1.bf16.msra.mxu0 0
    %651 = vmatprep.subr.bf16.mxu0 0
    %652 = vmatpush1.bf16.msra.mxu0 0
    %653 = vmatprep.subr.bf16.mxu0 0
    %654 = vmatpush1.bf16.msra.mxu0 0
    %655 = vmatprep.subr.bf16.mxu0 0
    %656 = vmatpush1.bf16.msra.mxu0 0
    %657 = vmatprep.subr.bf16.mxu0 0
    %658 = vmatpush1.bf16.msra.mxu0 0
    %659 = vmatprep.subr.bf16.mxu0 0
    %660 = vmatpush1.bf16.msra.mxu0 0
    %661 = vmatprep.subr.bf16.mxu0 0
    %662 = vmatpush1.bf16.msra.mxu0 0
    %663 = vmatprep.mubr.bf16.mxu0 0
    %664 = vmatmul.mubr.bf16.gmra.mrb[0].mxu0 %v626
    %v665 = vpop.f32.mrb[0].mxu0
    %v666 = vadd.f32 0.0, %v665
    %v667 = vpop.f32.mrb[0].mxu0
    %v668 = vpop.f32.mrb[0].mxu0
    %v669 = vpop.f32.mrb[0].mxu0
    %670 = vdwg.mxu0
    %v671 = vadd.f32 %v616, %v666
    %v672 = vadd.s32 %v520, 3
    %vm673 = vcmp.eq.s32.totalorder %v201, %v672
    %v674 = vsel %vm673, 1.0, 0.0
    %v675 = vpack.c.bf16 %v674, %v674
    %v677 = vsel %vm527, %v675, 0
    %v680 = vsel %vm531, %v516, 0
    %682 = vmatprep.subr.bf16.mxu0 0
    %683 = vmatpush1.bf16.msra.mxu0 %v680
    %684 = vmatprep.subr.bf16.mxu0 0
    %685 = vmatpush1.bf16.msra.mxu0 0
    %686 = vmatprep.subr.bf16.mxu0 0
    %687 = vmatpush1.bf16.msra.mxu0 0
    %688 = vmatprep.subr.bf16.mxu0 0
    %689 = vmatpush1.bf16.msra.mxu0 0
    %690 = vmatprep.subr.bf16.mxu0 0
    %691 = vmatpush1.bf16.msra.mxu0 0
    %692 = vmatprep.subr.bf16.mxu0 0
    %693 = vmatpush1.bf16.msra.mxu0 0
    %694 = vmatprep.subr.bf16.mxu0 0
    %695 = vmatpush1.bf16.msra.mxu0 0
    %696 = vmatprep.subr.bf16.mxu0 0
    %697 = vmatpush1.bf16.msra.mxu0 0
    %698 = vmatprep.subr.bf16.mxu0 0
    %699 = vmatpush1.bf16.msra.mxu0 0
    %700 = vmatprep.subr.bf16.mxu0 0
    %701 = vmatpush1.bf16.msra.mxu0 0
    %702 = vmatprep.subr.bf16.mxu0 0
    %703 = vmatpush1.bf16.msra.mxu0 0
    %704 = vmatprep.subr.bf16.mxu0 0
    %705 = vmatpush1.bf16.msra.mxu0 0
    %706 = vmatprep.subr.bf16.mxu0 0
    %707 = vmatpush1.bf16.msra.mxu0 0
    %708 = vmatprep.subr.bf16.mxu0 0
    %709 = vmatpush1.bf16.msra.mxu0 0
    %710 = vmatprep.subr.bf16.mxu0 0
    %711 = vmatpush1.bf16.msra.mxu0 0
    %712 = vmatprep.subr.bf16.mxu0 0
    %713 = vmatpush1.bf16.msra.mxu0 0
    %714 = vmatprep.mubr.bf16.mxu0 0
    %715 = vmatmul.mubr.bf16.gmra.mrb[0].mxu0 %v677
    %v716 = vpop.f32.mrb[0].mxu0
    %v717 = vadd.f32 0.0, %v716
    %v718 = vpop.f32.mrb[0].mxu0
    %v719 = vpop.f32.mrb[0].mxu0
    %v720 = vpop.f32.mrb[0].mxu0
    %721 = vdwg.mxu0
    %v722 = vadd.f32 %v671, %v717
    %v723 = vld [vmem:[#allocation5 + $0x1] sm:$0x1]
    %v724 = vlaneseq
    %v725 = vshrl.u32 %v724, 7
    %v726 = vsub.s32 0, %v725
    %v727 = vrot.slane %v723, %v726
    %v728 = vadd.f32 %v722, %v727
    %v729 = vmax.f32 %v728, 0.0
    %v730 = vld [vmem:[#allocation2 + $0x200] sm:$0xff]
    %v731 = vld [vmem:[#allocation2 + $0x208] sm:$0xff]
    %v732 = vld [vmem:[#allocation2 + $0x210] sm:$0xff]
    %v733 = vld [vmem:[#allocation2 + $0x218] sm:$0xff]
    %v734 = vld [vmem:[#allocation2 + $0x220] sm:$0xff]
    %v735 = vld [vmem:[#allocation2 + $0x228] sm:$0xff]
    %v736 = vld [vmem:[#allocation2 + $0x230] sm:$0xff]
    %v737 = vld [vmem:[#allocation2 + $0x238] sm:$0xff]
    %v738 = vld [vmem:[#allocation2 + $0x240] sm:$0xff]
    %v739 = vld [vmem:[#allocation2 + $0x248] sm:$0xff]
    %v740 = vld [vmem:[#allocation2 + $0x250] sm:$0xff]
    %v741 = vld [vmem:[#allocation2 + $0x258] sm:$0xff]
    %v742 = vld [vmem:[#allocation2 + $0x260] sm:$0xff]
    %v743 = vld [vmem:[#allocation2 + $0x268] sm:$0xff]
    %v744 = vld [vmem:[#allocation2 + $0x270] sm:$0xff]
    %v745 = vld [vmem:[#allocation2 + $0x278] sm:$0xff]
    %v746 = vld [vmem:[#allocation2 + $0x280] sm:$0xff]
    %v747 = vld [vmem:[#allocation2 + $0x288] sm:$0xff]
    %v748 = vld [vmem:[#allocation2 + $0x290] sm:$0xff]
    %v749 = vld [vmem:[#allocation2 + $0x298] sm:$0xff]
    %v750 = vld [vmem:[#allocation2 + $0x2a0] sm:$0xff]
    %v751 = vld [vmem:[#allocation2 + $0x2a8] sm:$0xff]
    %v752 = vld [vmem:[#allocation2 + $0x2b0] sm:$0xff]
    %v753 = vld [vmem:[#allocation2 + $0x2b8] sm:$0xff]
    %v754 = vld [vmem:[#allocation2 + $0x2c0] sm:$0xff]
    %v755 = vld [vmem:[#allocation2 + $0x2c8] sm:$0xff]
    %v756 = vld [vmem:[#allocation2 + $0x2d0] sm:$0xff]
    %v757 = vld [vmem:[#allocation2 + $0x2d8] sm:$0xff]
    %v758 = vld [vmem:[#allocation2 + $0x2e0] sm:$0xff]
    %v759 = vld [vmem:[#allocation2 + $0x2e8] sm:$0xff]
    %v760 = vld [vmem:[#allocation2 + $0x2f0] sm:$0xff]
    %v761 = vld [vmem:[#allocation2 + $0x2f8] sm:$0xff]
    %v762 = vpack.c.bf16 %v729, %v729
    %v795 = vunpack.c.l.b16 %v730
    %v796 = vunpack.c.h.b16 %v730
    %v797 = vunpack.c.l.b16 %v731
    %v798 = vunpack.c.h.b16 %v731
    %v799 = vunpack.c.l.b16 %v732
    %v800 = vunpack.c.h.b16 %v732
    %v801 = vunpack.c.l.b16 %v733
    %v802 = vunpack.c.h.b16 %v733
    %v803 = vunpack.c.l.b16 %v734
    %v804 = vunpack.c.h.b16 %v734
    %v805 = vunpack.c.l.b16 %v735
    %v806 = vunpack.c.h.b16 %v735
    %v807 = vunpack.c.l.b16 %v736
    %v808 = vunpack.c.h.b16 %v736
    %v809 = vunpack.c.l.b16 %v737
    %v810 = vunpack.c.h.b16 %v737
    %v811 = vunpack.c.l.b16 %v738
    %v812 = vunpack.c.h.b16 %v738
    %v813 = vunpack.c.l.b16 %v739
    %v814 = vunpack.c.h.b16 %v739
    %v815 = vunpack.c.l.b16 %v740
    %v816 = vunpack.c.h.b16 %v740
    %v817 = vunpack.c.l.b16 %v741
    %v818 = vunpack.c.h.b16 %v741
    %v819 = vunpack.c.l.b16 %v742
    %v820 = vunpack.c.h.b16 %v742
    %v821 = vunpack.c.l.b16 %v743
    %v822 = vunpack.c.h.b16 %v743
    %v823 = vunpack.c.l.b16 %v744
    %v824 = vunpack.c.h.b16 %v744
    %v825 = vunpack.c.l.b16 %v745
    %v826 = vunpack.c.h.b16 %v745
    %v827 = vunpack.c.l.b16 %v746
    %v828 = vunpack.c.h.b16 %v746
    %v829 = vunpack.c.l.b16 %v747
    %v830 = vunpack.c.h.b16 %v747
    %v831 = vunpack.c.l.b16 %v748
    %v832 = vunpack.c.h.b16 %v748
    %v833 = vunpack.c.l.b16 %v749
    %v834 = vunpack.c.h.b16 %v749
    %v835 = vunpack.c.l.b16 %v750
    %v836 = vunpack.c.h.b16 %v750
    %v837 = vunpack.c.l.b16 %v751
    %v838 = vunpack.c.h.b16 %v751
    %v839 = vunpack.c.l.b16 %v752
    %v840 = vunpack.c.h.b16 %v752
    %v841 = vunpack.c.l.b16 %v753
    %v842 = vunpack.c.h.b16 %v753
    %v843 = vunpack.c.l.b16 %v754
    %v844 = vunpack.c.h.b16 %v754
    %v845 = vunpack.c.l.b16 %v755
    %v846 = vunpack.c.h.b16 %v755
    %v847 = vunpack.c.l.b16 %v756
    %v848 = vunpack.c.h.b16 %v756
    %v849 = vunpack.c.l.b16 %v757
    %v850 = vunpack.c.h.b16 %v757
    %v851 = vunpack.c.l.b16 %v758
    %v852 = vunpack.c.h.b16 %v758
    %v853 = vunpack.c.l.b16 %v759
    %v854 = vunpack.c.h.b16 %v759
    %v855 = vunpack.c.l.b16 %v760
    %v856 = vunpack.c.h.b16 %v760
    %v857 = vunpack.c.l.b16 %v761
    %v858 = vunpack.c.h.b16 %v761
    %v859 = vpack.c.b16 %v799, %v795
    %v860 = vpack.c.b16 %v800, %v796
    %v861 = vpack.c.b16 %v801, %v797
    %v862 = vpack.c.b16 %v802, %v798
    %v863 = vpack.c.b16 %v807, %v803
    %v864 = vpack.c.b16 %v808, %v804
    %v865 = vpack.c.b16 %v809, %v805
    %v866 = vpack.c.b16 %v810, %v806
    %v867 = vpack.c.b16 %v815, %v811
    %v868 = vpack.c.b16 %v816, %v812
    %v869 = vpack.c.b16 %v817, %v813
    %v870 = vpack.c.b16 %v818, %v814
    %v871 = vpack.c.b16 %v823, %v819
    %v872 = vpack.c.b16 %v824, %v820
    %v873 = vpack.c.b16 %v825, %v821
    %v874 = vpack.c.b16 %v826, %v822
    %v875 = vpack.c.b16 %v831, %v827
    %v876 = vpack.c.b16 %v832, %v828
    %v877 = vpack.c.b16 %v833, %v829
    %v878 = vpack.c.b16 %v834, %v830
    %v879 = vpack.c.b16 %v839, %v835
    %v880 = vpack.c.b16 %v840, %v836
    %v881 = vpack.c.b16 %v841, %v837
    %v882 = vpack.c.b16 %v842, %v838
    %v883 = vpack.c.b16 %v847, %v843
    %v884 = vpack.c.b16 %v848, %v844
    %v885 = vpack.c.b16 %v849, %v845
    %v886 = vpack.c.b16 %v850, %v846
    %v887 = vpack.c.b16 %v855, %v851
    %v888 = vpack.c.b16 %v856, %v852
    %v889 = vpack.c.b16 %v857, %v853
    %v890 = vpack.c.b16 %v858, %v854
    %923 = vmatprep.subr.bf16.mxu0 %v860
    %924 = vmatpush1.bf16.msra.mxu0 %v859
    %925 = vmatprep.subr.bf16.mxu0 %v864
    %926 = vmatpush1.bf16.msra.mxu0 %v863
    %927 = vmatprep.subr.bf16.mxu0 %v868
    %928 = vmatpush1.bf16.msra.mxu0 %v867
    %929 = vmatprep.subr.bf16.mxu0 %v872
    %930 = vmatpush1.bf16.msra.mxu0 %v871
    %931 = vmatprep.subr.bf16.mxu0 %v876
    %932 = vmatpush1.bf16.msra.mxu0 %v875
    %933 = vmatprep.subr.bf16.mxu0 %v880
    %934 = vmatpush1.bf16.msra.mxu0 %v879
    %935 = vmatprep.subr.bf16.mxu0 %v884
    %936 = vmatpush1.bf16.msra.mxu0 %v883
    %937 = vmatprep.subr.bf16.mxu0 %v888
    %938 = vmatpush1.bf16.msra.mxu0 %v887
    %939 = vmatprep.subr.bf16.mxu0 0
    %940 = vmatpush1.bf16.msra.mxu0 0
    %941 = vmatprep.subr.bf16.mxu0 0
    %942 = vmatpush1.bf16.msra.mxu0 0
    %943 = vmatprep.subr.bf16.mxu0 0
    %944 = vmatpush1.bf16.msra.mxu0 0
    %945 = vmatprep.subr.bf16.mxu0 0
    %946 = vmatpush1.bf16.msra.mxu0 0
    %947 = vmatprep.subr.bf16.mxu0 0
    %948 = vmatpush1.bf16.msra.mxu0 0
    %949 = vmatprep.subr.bf16.mxu0 0
    %950 = vmatpush1.bf16.msra.mxu0 0
    %951 = vmatprep.subr.bf16.mxu0 0
    %952 = vmatpush1.bf16.msra.mxu0 0
    %953 = vmatprep.subr.bf16.mxu0 0
    %954 = vmatpush1.bf16.msra.mxu0 0
    %955 = vmatprep.mubr.bf16.mxu0 0
    %956 = vmatmul.mubr.bf16.gmra.mrb[0].mxu0 %v762
    %v957 = vpop.f32.mrb[0].mxu0
    %v958 = vadd.f32 0.0, %v957
    %v959 = vpop.f32.mrb[0].mxu0
    %v960 = vadd.f32 0.0, %v959
    %v961 = vpop.f32.mrb[0].mxu0
    %v962 = vpop.f32.mrb[0].mxu0
    %963 = vdwg.mxu0
    %964 = vmatprep.subr.bf16.mxu0 %v862
    %965 = vmatpush1.bf16.msra.mxu0 %v861
    %966 = vmatprep.subr.bf16.mxu0 %v866
    %967 = vmatpush1.bf16.msra.mxu0 %v865
    %968 = vmatprep.subr.bf16.mxu0 %v870
    %969 = vmatpush1.bf16.msra.mxu0 %v869
    %970 = vmatprep.subr.bf16.mxu0 %v874
    %971 = vmatpush1.bf16.msra.mxu0 %v873
    %972 = vmatprep.subr.bf16.mxu0 %v878
    %973 = vmatpush1.bf16.msra.mxu0 %v877
    %974 = vmatprep.subr.bf16.mxu0 %v882
    %975 = vmatpush1.bf16.msra.mxu0 %v881
    %976 = vmatprep.subr.bf16.mxu0 %v886
    %977 = vmatpush1.bf16.msra.mxu0 %v885
    %978 = vmatprep.subr.bf16.mxu0 %v890
    %979 = vmatpush1.bf16.msra.mxu0 %v889
    %980 = vmatprep.subr.bf16.mxu0 0
    %981 = vmatpush1.bf16.msra.mxu0 0
    %982 = vmatprep.subr.bf16.mxu0 0
    %983 = vmatpush1.bf16.msra.mxu0 0
    %984 = vmatprep.subr.bf16.mxu0 0
    %985 = vmatpush1.bf16.msra.mxu0 0
    %986 = vmatprep.subr.bf16.mxu0 0
    %987 = vmatpush1.bf16.msra.mxu0 0
    %988 = vmatprep.subr.bf16.mxu0 0
    %989 = vmatpush1.bf16.msra.mxu0 0
    %990 = vmatprep.subr.bf16.mxu0 0
    %991 = vmatpush1.bf16.msra.mxu0 0
    %992 = vmatprep.subr.bf16.mxu0 0
    %993 = vmatpush1.bf16.msra.mxu0 0
    %994 = vmatprep.subr.bf16.mxu0 0
    %995 = vmatpush1.bf16.msra.mxu0 0
    %996 = vmatprep.mubr.bf16.mxu0 0
    %997 = vmatmul.mubr.bf16.gmra.mrb[0].mxu0 %v762
    %v998 = vpop.f32.mrb[0].mxu0
    %v999 = vadd.f32 0.0, %v998
    %v1000 = vpop.f32.mrb[0].mxu0
    %v1001 = vadd.f32 0.0, %v1000
    %v1002 = vpop.f32.mrb[0].mxu0
    %v1003 = vpop.f32.mrb[0].mxu0
    %1004 = vdwg.mxu0
    %v1005 = vpack.c.bf16 %v958, %v958
    %v1006 = vpack.c.bf16 %v960, %v960
    %v1007 = vpack.c.bf16 %v999, %v999
    %v1008 = vpack.c.bf16 %v1001, %v1001
    %v1009 = vadd.s32 %v201, 8
    %vm1010 = vcmp.eq.s32.totalorder %v1009, %v520
    %v1011 = vsel %vm1010, 1.0, 0.0
    %v1012 = vpack.c.bf16 %v1011, %v522
    %vm1013 = vcmp.eq.s32.totalorder %v1009, %v519
    %v1014 = vsel %vm1013, 1.0, 0.0
    %v1015 = vpack.c.bf16 %v1014, %v525
    %vm1016 = vcmask 64512
    %v1018 = vsel %vm1016, %v1015, 0
    %vm1020 = vcmask 1043456
    %v1022 = vsel %vm1020, %v1006, 0
    %1024 = vmatprep.subr.bf16.mxu0 0
    %1025 = vmatpush1.bf16.msra.mxu0 %v1022
    %1026 = vmatprep.subr.bf16.mxu0 0
    %1027 = vmatpush1.bf16.msra.mxu0 0
    %1028 = vmatprep.subr.bf16.mxu0 0
    %1029 = vmatpush1.bf16.msra.mxu0 0
    %1030 = vmatprep.subr.bf16.mxu0 0
    %1031 = vmatpush1.bf16.msra.mxu0 0
    %1032 = vmatprep.subr.bf16.mxu0 0
    %1033 = vmatpush1.bf16.msra.mxu0 0
    %1034 = vmatprep.subr.bf16.mxu0 0
    %1035 = vmatpush1.bf16.msra.mxu0 0
    %1036 = vmatprep.subr.bf16.mxu0 0
    %1037 = vmatpush1.bf16.msra.mxu0 0
    %1038 = vmatprep.subr.bf16.mxu0 0
    %1039 = vmatpush1.bf16.msra.mxu0 0
    %1040 = vmatprep.subr.bf16.mxu0 0
    %1041 = vmatpush1.bf16.msra.mxu0 0
    %1042 = vmatprep.subr.bf16.mxu0 0
    %1043 = vmatpush1.bf16.msra.mxu0 0
    %1044 = vmatprep.subr.bf16.mxu0 0
    %1045 = vmatpush1.bf16.msra.mxu0 0
    %1046 = vmatprep.subr.bf16.mxu0 0
    %1047 = vmatpush1.bf16.msra.mxu0 0
    %1048 = vmatprep.subr.bf16.mxu0 0
    %1049 = vmatpush1.bf16.msra.mxu0 0
    %1050 = vmatprep.subr.bf16.mxu0 0
    %1051 = vmatpush1.bf16.msra.mxu0 0
    %1052 = vmatprep.subr.bf16.mxu0 0
    %1053 = vmatpush1.bf16.msra.mxu0 0
    %1054 = vmatprep.subr.bf16.mxu0 0
    %1055 = vmatpush1.bf16.msra.mxu0 0
    %1056 = vmatprep.mubr.bf16.mxu0 0
    %1057 = vmatmul.mubr.bf16.gmra.mrb[0].mxu0 %v1018
    %v1058 = vpop.f32.mrb[0].mxu0
    %v1059 = vadd.f32 0.0, %v1058
    %v1060 = vpop.f32.mrb[0].mxu0
    %v1061 = vpop.f32.mrb[0].mxu0
    %v1062 = vadd.f32 0.0, %v1061
    %v1063 = vpop.f32.mrb[0].mxu0
    %1064 = vdwg.mxu0
    %v1066 = vsel %vm1016, %v1012, 0
    %v1069 = vsel %vm1020, %v1005, 0
    %1071 = vmatprep.subr.bf16.mxu0 0
    %1072 = vmatpush1.bf16.msra.mxu0 %v1069
    %1073 = vmatprep.subr.bf16.mxu0 0
    %1074 = vmatpush1.bf16.msra.mxu0 0
    %1075 = vmatprep.subr.bf16.mxu0 0
    %1076 = vmatpush1.bf16.msra.mxu0 0
    %1077 = vmatprep.subr.bf16.mxu0 0
    %1078 = vmatpush1.bf16.msra.mxu0 0
    %1079 = vmatprep.subr.bf16.mxu0 0
    %1080 = vmatpush1.bf16.msra.mxu0 0
    %1081 = vmatprep.subr.bf16.mxu0 0
    %1082 = vmatpush1.bf16.msra.mxu0 0
    %1083 = vmatprep.subr.bf16.mxu0 0
    %1084 = vmatpush1.bf16.msra.mxu0 0
    %1085 = vmatprep.subr.bf16.mxu0 0
    %1086 = vmatpush1.bf16.msra.mxu0 0
    %1087 = vmatprep.subr.bf16.mxu0 0
    %1088 = vmatpush1.bf16.msra.mxu0 0
    %1089 = vmatprep.subr.bf16.mxu0 0
    %1090 = vmatpush1.bf16.msra.mxu0 0
    %1091 = vmatprep.subr.bf16.mxu0 0
    %1092 = vmatpush1.bf16.msra.mxu0 0
    %1093 = vmatprep.subr.bf16.mxu0 0
    %1094 = vmatpush1.bf16.msra.mxu0 0
    %1095 = vmatprep.subr.bf16.mxu0 0
    %1096 = vmatpush1.bf16.msra.mxu0 0
    %1097 = vmatprep.subr.bf16.mxu0 0
    %1098 = vmatpush1.bf16.msra.mxu0 0
    %1099 = vmatprep.subr.bf16.mxu0 0
    %1100 = vmatpush1.bf16.msra.mxu0 0
    %1101 = vmatprep.subr.bf16.mxu0 0
    %1102 = vmatpush1.bf16.msra.mxu0 0
    %1103 = vmatprep.mubr.bf16.mxu0 0
    %1104 = vmatmul.mubr.bf16.gmra.mrb[0].mxu0 %v1066
    %v1105 = vpop.f32.mrb[0].mxu0
    %v1106 = vadd.f32 %v1059, %v1105
    %v1107 = vpop.f32.mrb[0].mxu0
    %v1108 = vpop.f32.mrb[0].mxu0
    %v1109 = vadd.f32 %v1062, %v1108
    %v1110 = vpop.f32.mrb[0].mxu0
    %1111 = vdwg.mxu0
    %vm1112 = vcmp.eq.s32.totalorder %v1009, %v621
    %v1113 = vsel %vm1112, 1.0, 0.0
    %v1114 = vpack.c.bf16 %v1113, %v623
    %v1116 = vsel %vm1016, %v1114, 0
    %v1119 = vsel %vm1020, %v1007, 0
    %1121 = vmatprep.subr.bf16.mxu0 0
    %1122 = vmatpush1.bf16.msra.mxu0 %v1119
    %1123 = vmatprep.subr.bf16.mxu0 0
    %1124 = vmatpush1.bf16.msra.mxu0 0
    %1125 = vmatprep.subr.bf16.mxu0 0
    %1126 = vmatpush1.bf16.msra.mxu0 0
    %1127 = vmatprep.subr.bf16.mxu0 0
    %1128 = vmatpush1.bf16.msra.mxu0 0
    %1129 = vmatprep.subr.bf16.mxu0 0
    %1130 = vmatpush1.bf16.msra.mxu0 0
    %1131 = vmatprep.subr.bf16.mxu0 0
    %1132 = vmatpush1.bf16.msra.mxu0 0
    %1133 = vmatprep.subr.bf16.mxu0 0
    %1134 = vmatpush1.bf16.msra.mxu0 0
    %1135 = vmatprep.subr.bf16.mxu0 0
    %1136 = vmatpush1.bf16.msra.mxu0 0
    %1137 = vmatprep.subr.bf16.mxu0 0
    %1138 = vmatpush1.bf16.msra.mxu0 0
    %1139 = vmatprep.subr.bf16.mxu0 0
    %1140 = vmatpush1.bf16.msra.mxu0 0
    %1141 = vmatprep.subr.bf16.mxu0 0
    %1142 = vmatpush1.bf16.msra.mxu0 0
    %1143 = vmatprep.subr.bf16.mxu0 0
    %1144 = vmatpush1.bf16.msra.mxu0 0
    %1145 = vmatprep.subr.bf16.mxu0 0
    %1146 = vmatpush1.bf16.msra.mxu0 0
    %1147 = vmatprep.subr.bf16.mxu0 0
    %1148 = vmatpush1.bf16.msra.mxu0 0
    %1149 = vmatprep.subr.bf16.mxu0 0
    %1150 = vmatpush1.bf16.msra.mxu0 0
    %1151 = vmatprep.subr.bf16.mxu0 0
    %1152 = vmatpush1.bf16.msra.mxu0 0
    %1153 = vmatprep.mubr.bf16.mxu0 0
    %1154 = vmatmul.mubr.bf16.gmra.mrb[0].mxu0 %v1116
    %v1155 = vpop.f32.mrb[0].mxu0
    %v1156 = vadd.f32 0.0, %v1155
    %v1157 = vpop.f32.mrb[0].mxu0
    %v1158 = vpop.f32.mrb[0].mxu0
    %v1159 = vadd.f32 0.0, %v1158
    %v1160 = vpop.f32.mrb[0].mxu0
    %1161 = vdwg.mxu0
    %v1162 = vadd.f32 %v1106, %v1156
    %v1163 = vadd.f32 %v1109, %v1159
    %vm1164 = vcmp.eq.s32.totalorder %v1009, %v672
    %v1165 = vsel %vm1164, 1.0, 0.0
    %v1166 = vpack.c.bf16 %v1165, %v674
    %v1168 = vsel %vm1016, %v1166, 0
    %v1171 = vsel %vm1020, %v1008, 0
    %1173 = vmatprep.subr.bf16.mxu0 0
    %1174 = vmatpush1.bf16.msra.mxu0 %v1171
    %1175 = vmatprep.subr.bf16.mxu0 0
    %1176 = vmatpush1.bf16.msra.mxu0 0
    %1177 = vmatprep.subr.bf16.mxu0 0
    %1178 = vmatpush1.bf16.msra.mxu0 0
    %1179 = vmatprep.subr.bf16.mxu0 0
    %1180 = vmatpush1.bf16.msra.mxu0 0
    %1181 = vmatprep.subr.bf16.mxu0 0
    %1182 = vmatpush1.bf16.msra.mxu0 0
    %1183 = vmatprep.subr.bf16.mxu0 0
    %1184 = vmatpush1.bf16.msra.mxu0 0
    %1185 = vmatprep.subr.bf16.mxu0 0
    %1186 = vmatpush1.bf16.msra.mxu0 0
    %1187 = vmatprep.subr.bf16.mxu0 0
    %1188 = vmatpush1.bf16.msra.mxu0 0
    %1189 = vmatprep.subr.bf16.mxu0 0
    %1190 = vmatpush1.bf16.msra.mxu0 0
    %1191 = vmatprep.subr.bf16.mxu0 0
    %1192 = vmatpush1.bf16.msra.mxu0 0
    %1193 = vmatprep.subr.bf16.mxu0 0
    %1194 = vmatpush1.bf16.msra.mxu0 0
    %1195 = vmatprep.subr.bf16.mxu0 0
    %1196 = vmatpush1.bf16.msra.mxu0 0
    %1197 = vmatprep.subr.bf16.mxu0 0
    %1198 = vmatpush1.bf16.msra.mxu0 0
    %1199 = vmatprep.subr.bf16.mxu0 0
    %1200 = vmatpush1.bf16.msra.mxu0 0
    %1201 = vmatprep.subr.bf16.mxu0 0
    %1202 = vmatpush1.bf16.msra.mxu0 0
    %1203 = vmatprep.subr.bf16.mxu0 0
    %1204 = vmatpush1.bf16.msra.mxu0 0
    %1205 = vmatprep.mubr.bf16.mxu0 0
    %1206 = vmatmul.mubr.bf16.gmra.mrb[0].mxu0 %v1168
    %v1207 = vpop.f32.mrb[0].mxu0
    %v1208 = vadd.f32 0.0, %v1207
    %v1209 = vpop.f32.mrb[0].mxu0
    %v1210 = vpop.f32.mrb[0].mxu0
    %v1211 = vadd.f32 0.0, %v1210
    %v1212 = vpop.f32.mrb[0].mxu0
    %1213 = vdwg.mxu0
    %v1214 = vadd.f32 %v1162, %v1208
    %v1215 = vadd.f32 %v1163, %v1211
    %v1216 = vld [vmem:[#allocation5 + $0x3] sm:$0x1]
    %v1217 = vlaneseq
    %v1218 = vshrl.u32 %v1217, 7
    %v1219 = vsub.s32 0, %v1218
    %v1220 = vrot.slane %v1216, %v1219
    %v1221 = vadd.f32 %v1214, %v1220
    %v1222 = vadd.f32 %v1215, %v1220
    %v1223 = vmax.f32 %v1221, 0.0
    %v1224 = vmax.f32 %v1222, 0.0
    %v1225 = vld [vmem:[#allocation2 + $0x300] sm:$0xff]
    %v1226 = vld [vmem:[#allocation2 + $0x308] sm:$0xff]
    %v1227 = vld [vmem:[#allocation2 + $0x310] sm:$0xff]
    %v1228 = vld [vmem:[#allocation2 + $0x318] sm:$0xff]
    %v1229 = vld [vmem:[#allocation2 + $0x320] sm:$0xff]
    %v1230 = vld [vmem:[#allocation2 + $0x328] sm:$0xff]
    %v1231 = vld [vmem:[#allocation2 + $0x330] sm:$0xff]
    %v1232 = vld [vmem:[#allocation2 + $0x338] sm:$0xff]
    %v1233 = vld [vmem:[#allocation2 + $0x340] sm:$0xff]
    %v1234 = vld [vmem:[#allocation2 + $0x348] sm:$0xff]
    %v1235 = vld [vmem:[#allocation2 + $0x350] sm:$0xff]
    %v1236 = vld [vmem:[#allocation2 + $0x358] sm:$0xff]
    %v1237 = vld [vmem:[#allocation2 + $0x360] sm:$0xff]
    %v1238 = vld [vmem:[#allocation2 + $0x368] sm:$0xff]
    %v1239 = vld [vmem:[#allocation2 + $0x370] sm:$0xff]
    %v1240 = vld [vmem:[#allocation2 + $0x378] sm:$0xff]
    %v1241 = vld [vmem:[#allocation2 + $0x380] sm:$0xff]
    %v1242 = vld [vmem:[#allocation2 + $0x388] sm:$0xff]
    %v1243 = vld [vmem:[#allocation2 + $0x390] sm:$0xff]
    %v1244 = vld [vmem:[#allocation2 + $0x398] sm:$0xff]
    %v1245 = vld [vmem:[#allocation2 + $0x3a0] sm:$0xff]
    %v1246 = vld [vmem:[#allocation2 + $0x3a8] sm:$0xff]
    %v1247 = vld [vmem:[#allocation2 + $0x3b0] sm:$0xff]
    %v1248 = vld [vmem:[#allocation2 + $0x3b8] sm:$0xff]
    %v1249 = vld [vmem:[#allocation2 + $0x3c0] sm:$0xff]
    %v1250 = vld [vmem:[#allocation2 + $0x3c8] sm:$0xff]
    %v1251 = vld [vmem:[#allocation2 + $0x3d0] sm:$0xff]
    %v1252 = vld [vmem:[#allocation2 + $0x3d8] sm:$0xff]
    %v1253 = vld [vmem:[#allocation2 + $0x3e0] sm:$0xff]
    %v1254 = vld [vmem:[#allocation2 + $0x3e8] sm:$0xff]
    %v1255 = vld [vmem:[#allocation2 + $0x3f0] sm:$0xff]
    %v1256 = vld [vmem:[#allocation2 + $0x3f8] sm:$0xff]
    %v1257 = vpack.c.bf16 %v1224, %v1223
    %v1290 = vunpack.c.l.b16 %v1225
    %v1291 = vunpack.c.h.b16 %v1225
    %v1292 = vunpack.c.l.b16 %v1226
    %v1293 = vunpack.c.h.b16 %v1226
    %v1294 = vunpack.c.l.b16 %v1227
    %v1295 = vunpack.c.h.b16 %v1227
    %v1296 = vunpack.c.l.b16 %v1228
    %v1297 = vunpack.c.h.b16 %v1228
    %v1298 = vunpack.c.l.b16 %v1229
    %v1299 = vunpack.c.h.b16 %v1229
    %v1300 = vunpack.c.l.b16 %v1230
    %v1301 = vunpack.c.h.b16 %v1230
    %v1302 = vunpack.c.l.b16 %v1231
    %v1303 = vunpack.c.h.b16 %v1231
    %v1304 = vunpack.c.l.b16 %v1232
    %v1305 = vunpack.c.h.b16 %v1232
    %v1306 = vunpack.c.l.b16 %v1233
    %v1307 = vunpack.c.h.b16 %v1233
    %v1308 = vunpack.c.l.b16 %v1234
    %v1309 = vunpack.c.h.b16 %v1234
    %v1310 = vunpack.c.l.b16 %v1235
    %v1311 = vunpack.c.h.b16 %v1235
    %v1312 = vunpack.c.l.b16 %v1236
    %v1313 = vunpack.c.h.b16 %v1236
    %v1314 = vunpack.c.l.b16 %v1237
    %v1315 = vunpack.c.h.b16 %v1237
    %v1316 = vunpack.c.l.b16 %v1238
    %v1317 = vunpack.c.h.b16 %v1238
    %v1318 = vunpack.c.l.b16 %v1239
    %v1319 = vunpack.c.h.b16 %v1239
    %v1320 = vunpack.c.l.b16 %v1240
    %v1321 = vunpack.c.h.b16 %v1240
    %v1322 = vunpack.c.l.b16 %v1241
    %v1323 = vunpack.c.h.b16 %v1241
    %v1324 = vunpack.c.l.b16 %v1242
    %v1325 = vunpack.c.h.b16 %v1242
    %v1326 = vunpack.c.l.b16 %v1243
    %v1327 = vunpack.c.h.b16 %v1243
    %v1328 = vunpack.c.l.b16 %v1244
    %v1329 = vunpack.c.h.b16 %v1244
    %v1330 = vunpack.c.l.b16 %v1245
    %v1331 = vunpack.c.h.b16 %v1245
    %v1332 = vunpack.c.l.b16 %v1246
    %v1333 = vunpack.c.h.b16 %v1246
    %v1334 = vunpack.c.l.b16 %v1247
    %v1335 = vunpack.c.h.b16 %v1247
    %v1336 = vunpack.c.l.b16 %v1248
    %v1337 = vunpack.c.h.b16 %v1248
    %v1338 = vunpack.c.l.b16 %v1249
    %v1339 = vunpack.c.h.b16 %v1249
    %v1340 = vunpack.c.l.b16 %v1250
    %v1341 = vunpack.c.h.b16 %v1250
    %v1342 = vunpack.c.l.b16 %v1251
    %v1343 = vunpack.c.h.b16 %v1251
    %v1344 = vunpack.c.l.b16 %v1252
    %v1345 = vunpack.c.h.b16 %v1252
    %v1346 = vunpack.c.l.b16 %v1253
    %v1347 = vunpack.c.h.b16 %v1253
    %v1348 = vunpack.c.l.b16 %v1254
    %v1349 = vunpack.c.h.b16 %v1254
    %v1350 = vunpack.c.l.b16 %v1255
    %v1351 = vunpack.c.h.b16 %v1255
    %v1352 = vunpack.c.l.b16 %v1256
    %v1353 = vunpack.c.h.b16 %v1256
    %v1354 = vpack.c.b16 %v1294, %v1290
    %v1355 = vpack.c.b16 %v1295, %v1291
    %v1356 = vpack.c.b16 %v1296, %v1292
    %v1357 = vpack.c.b16 %v1297, %v1293
    %v1358 = vpack.c.b16 %v1302, %v1298
    %v1359 = vpack.c.b16 %v1303, %v1299
    %v1360 = vpack.c.b16 %v1304, %v1300
    %v1361 = vpack.c.b16 %v1305, %v1301
    %v1362 = vpack.c.b16 %v1310, %v1306
    %v1363 = vpack.c.b16 %v1311, %v1307
    %v1364 = vpack.c.b16 %v1312, %v1308
    %v1365 = vpack.c.b16 %v1313, %v1309
    %v1366 = vpack.c.b16 %v1318, %v1314
    %v1367 = vpack.c.b16 %v1319, %v1315
    %v1368 = vpack.c.b16 %v1320, %v1316
    %v1369 = vpack.c.b16 %v1321, %v1317
    %v1370 = vpack.c.b16 %v1326, %v1322
    %v1371 = vpack.c.b16 %v1327, %v1323
    %v1372 = vpack.c.b16 %v1328, %v1324
    %v1373 = vpack.c.b16 %v1329, %v1325
    %v1374 = vpack.c.b16 %v1334, %v1330
    %v1375 = vpack.c.b16 %v1335, %v1331
    %v1376 = vpack.c.b16 %v1336, %v1332
    %v1377 = vpack.c.b16 %v1337, %v1333
    %v1378 = vpack.c.b16 %v1342, %v1338
    %v1379 = vpack.c.b16 %v1343, %v1339
    %v1380 = vpack.c.b16 %v1344, %v1340
    %v1381 = vpack.c.b16 %v1345, %v1341
    %v1382 = vpack.c.b16 %v1350, %v1346
    %v1383 = vpack.c.b16 %v1351, %v1347
    %v1384 = vpack.c.b16 %v1352, %v1348
    %v1385 = vpack.c.b16 %v1353, %v1349
    %1418 = vmatprep.subr.bf16.mxu0 %v1355
    %1419 = vmatpush1.bf16.msra.mxu0 %v1354
    %1420 = vmatprep.subr.bf16.mxu0 %v1359
    %1421 = vmatpush1.bf16.msra.mxu0 %v1358
    %1422 = vmatprep.subr.bf16.mxu0 %v1363
    %1423 = vmatpush1.bf16.msra.mxu0 %v1362
    %1424 = vmatprep.subr.bf16.mxu0 %v1367
    %1425 = vmatpush1.bf16.msra.mxu0 %v1366
    %1426 = vmatprep.subr.bf16.mxu0 %v1371
    %1427 = vmatpush1.bf16.msra.mxu0 %v1370
    %1428 = vmatprep.subr.bf16.mxu0 %v1375
    %1429 = vmatpush1.bf16.msra.mxu0 %v1374
    %1430 = vmatprep.subr.bf16.mxu0 %v1379
    %1431 = vmatpush1.bf16.msra.mxu0 %v1378
    %1432 = vmatprep.subr.bf16.mxu0 %v1383
    %1433 = vmatpush1.bf16.msra.mxu0 %v1382
    %1434 = vmatprep.subr.bf16.mxu0 0
    %1435 = vmatpush1.bf16.msra.mxu0 0
    %1436 = vmatprep.subr.bf16.mxu0 0
    %1437 = vmatpush1.bf16.msra.mxu0 0
    %1438 = vmatprep.subr.bf16.mxu0 0
    %1439 = vmatpush1.bf16.msra.mxu0 0
    %1440 = vmatprep.subr.bf16.mxu0 0
    %1441 = vmatpush1.bf16.msra.mxu0 0
    %1442 = vmatprep.subr.bf16.mxu0 0
    %1443 = vmatpush1.bf16.msra.mxu0 0
    %1444 = vmatprep.subr.bf16.mxu0 0
    %1445 = vmatpush1.bf16.msra.mxu0 0
    %1446 = vmatprep.subr.bf16.mxu0 0
    %1447 = vmatpush1.bf16.msra.mxu0 0
    %1448 = vmatprep.subr.bf16.mxu0 0
    %1449 = vmatpush1.bf16.msra.mxu0 0
    %1450 = vmatprep.mubr.bf16.mxu0 0
    %1451 = vmatmul.mubr.bf16.gmra.mrb[0].mxu0 %v1257
    %v1452 = vpop.f32.mrb[0].mxu0
    %v1453 = vadd.f32 0.0, %v1452
    %v1454 = vpop.f32.mrb[0].mxu0
    %v1455 = vadd.f32 0.0, %v1454
    %v1456 = vpop.f32.mrb[0].mxu0
    %v1457 = vadd.f32 0.0, %v1456
    %v1458 = vpop.f32.mrb[0].mxu0
    %v1459 = vadd.f32 0.0, %v1458
    %1460 = vdwg.mxu0
    %1461 = vmatprep.subr.bf16.mxu0 %v1357
    %1462 = vmatpush1.bf16.msra.mxu0 %v1356
    %1463 = vmatprep.subr.bf16.mxu0 %v1361
    %1464 = vmatpush1.bf16.msra.mxu0 %v1360
    %1465 = vmatprep.subr.bf16.mxu0 %v1365
    %1466 = vmatpush1.bf16.msra.mxu0 %v1364
    %1467 = vmatprep.subr.bf16.mxu0 %v1369
    %1468 = vmatpush1.bf16.msra.mxu0 %v1368
    %1469 = vmatprep.subr.bf16.mxu0 %v1373
    %1470 = vmatpush1.bf16.msra.mxu0 %v1372
    %1471 = vmatprep.subr.bf16.mxu0 %v1377
    %1472 = vmatpush1.bf16.msra.mxu0 %v1376
    %1473 = vmatprep.subr.bf16.mxu0 %v1381
    %1474 = vmatpush1.bf16.msra.mxu0 %v1380
    %1475 = vmatprep.subr.bf16.mxu0 %v1385
    %1476 = vmatpush1.bf16.msra.mxu0 %v1384
    %1477 = vmatprep.subr.bf16.mxu0 0
    %1478 = vmatpush1.bf16.msra.mxu0 0
    %1479 = vmatprep.subr.bf16.mxu0 0
    %1480 = vmatpush1.bf16.msra.mxu0 0
    %1481 = vmatprep.subr.bf16.mxu0 0
    %1482 = vmatpush1.bf16.msra.mxu0 0
    %1483 = vmatprep.subr.bf16.mxu0 0
    %1484 = vmatpush1.bf16.msra.mxu0 0
    %1485 = vmatprep.subr.bf16.mxu0 0
    %1486 = vmatpush1.bf16.msra.mxu0 0
    %1487 = vmatprep.subr.bf16.mxu0 0
    %1488 = vmatpush1.bf16.msra.mxu0 0
    %1489 = vmatprep.subr.bf16.mxu0 0
    %1490 = vmatpush1.bf16.msra.mxu0 0
    %1491 = vmatprep.subr.bf16.mxu0 0
    %1492 = vmatpush1.bf16.msra.mxu0 0
    %1493 = vmatprep.mubr.bf16.mxu0 0
    %1494 = vmatmul.mubr.bf16.gmra.mrb[0].mxu0 %v1257
    %v1495 = vpop.f32.mrb[0].mxu0
    %v1496 = vadd.f32 0.0, %v1495
    %v1497 = vpop.f32.mrb[0].mxu0
    %v1498 = vadd.f32 0.0, %v1497
    %v1499 = vpop.f32.mrb[0].mxu0
    %v1500 = vadd.f32 0.0, %v1499
    %v1501 = vpop.f32.mrb[0].mxu0
    %v1502 = vadd.f32 0.0, %v1501
    %1503 = vdwg.mxu0
    %v1504 = vpack.c.bf16 %v1457, %v1453
    %v1505 = vpack.c.bf16 %v1459, %v1455
    %v1506 = vpack.c.bf16 %v1500, %v1496
    %v1507 = vpack.c.bf16 %v1502, %v1498
    %v1508 = vadd.s32 %v201, 16
    %v1509 = vadd.s32 %v201, 24
    %vm1510 = vcmp.eq.s32.totalorder %v1508, %v520
    %vm1511 = vcmp.eq.s32.totalorder %v1509, %v520
    %v1512 = vsel %vm1510, 1.0, 0.0
    %v1513 = vsel %vm1511, 1.0, 0.0
    %v1514 = vpack.c.bf16 %v1513, %v1512
    %vm1515 = vcmp.eq.s32.totalorder %v1508, %v519
    %vm1516 = vcmp.eq.s32.totalorder %v1509, %v519
    %v1517 = vsel %vm1515, 1.0, 0.0
    %v1518 = vsel %vm1516, 1.0, 0.0
    %v1519 = vpack.c.bf16 %v1518, %v1517
    %vm1520 = vcmask 130048
    %v1521 = vsel %vm1520, %v1015, 0
    %v1524 = vsel %vm1520, %v1519, 0
    %1526 = vmatprep.subr.bf16.mxu0 0
    %1527 = vmatpush1.bf16.msra.mxu0 %v1505
    %1528 = vmatprep.subr.bf16.mxu0 0
    %1529 = vmatpush1.bf16.msra.mxu0 0
    %1530 = vmatprep.subr.bf16.mxu0 0
    %1531 = vmatpush1.bf16.msra.mxu0 0
    %1532 = vmatprep.subr.bf16.mxu0 0
    %1533 = vmatpush1.bf16.msra.mxu0 0
    %1534 = vmatprep.subr.bf16.mxu0 0
    %1535 = vmatpush1.bf16.msra.mxu0 0
    %1536 = vmatprep.subr.bf16.mxu0 0
    %1537 = vmatpush1.bf16.msra.mxu0 0
    %1538 = vmatprep.subr.bf16.mxu0 0
    %1539 = vmatpush1.bf16.msra.mxu0 0
    %1540 = vmatprep.subr.bf16.mxu0 0
    %1541 = vmatpush1.bf16.msra.mxu0 0
    %1542 = vmatprep.subr.bf16.mxu0 0
    %1543 = vmatpush1.bf16.msra.mxu0 0
    %1544 = vmatprep.subr.bf16.mxu0 0
    %1545 = vmatpush1.bf16.msra.mxu0 0
    %1546 = vmatprep.subr.bf16.mxu0 0
    %1547 = vmatpush1.bf16.msra.mxu0 0
    %1548 = vmatprep.subr.bf16.mxu0 0
    %1549 = vmatpush1.bf16.msra.mxu0 0
    %1550 = vmatprep.subr.bf16.mxu0 0
    %1551 = vmatpush1.bf16.msra.mxu0 0
    %1552 = vmatprep.subr.bf16.mxu0 0
    %1553 = vmatpush1.bf16.msra.mxu0 0
    %1554 = vmatprep.subr.bf16.mxu0 0
    %1555 = vmatpush1.bf16.msra.mxu0 0
    %1556 = vmatprep.subr.bf16.mxu0 0
    %1557 = vmatpush1.bf16.msra.mxu0 0
    %1558 = vmatprep.mubr.bf16.mxu0 0
    %1559 = vmatmul.mubr.bf16.gmra.mrb[0].mxu0 %v1521
    %v1560 = vpop.f32.mrb[0].mxu0
    %v1561 = vadd.f32 0.0, %v1560
    %v1562 = vpop.f32.mrb[0].mxu0
    %v1563 = vpop.f32.mrb[0].mxu0
    %v1564 = vadd.f32 0.0, %v1563
    %v1565 = vpop.f32.mrb[0].mxu0
    %1566 = vmatprep.mubr.bf16.mxu0 0
    %1567 = vmatmul.mubr.bf16.gmra.mrb[0].mxu0 %v1524
    %v1568 = vpop.f32.mrb[0].mxu0
    %v1569 = vadd.f32 0.0, %v1568
    %v1570 = vpop.f32.mrb[0].mxu0
    %v1571 = vpop.f32.mrb[0].mxu0
    %v1572 = vadd.f32 0.0, %v1571
    %v1573 = vpop.f32.mrb[0].mxu0
    %1574 = vdwg.mxu0
    %v1575 = vsel %vm1520, %v1012, 0
    %v1578 = vsel %vm1520, %v1514, 0
    %1580 = vmatprep.subr.bf16.mxu0 0
    %1581 = vmatpush1.bf16.msra.mxu0 %v1504
    %1582 = vmatprep.subr.bf16.mxu0 0
    %1583 = vmatpush1.bf16.msra.mxu0 0
    %1584 = vmatprep.subr.bf16.mxu0 0
    %1585 = vmatpush1.bf16.msra.mxu0 0
    %1586 = vmatprep.subr.bf16.mxu0 0
    %1587 = vmatpush1.bf16.msra.mxu0 0
    %1588 = vmatprep.subr.bf16.mxu0 0
    %1589 = vmatpush1.bf16.msra.mxu0 0
    %1590 = vmatprep.subr.bf16.mxu0 0
    %1591 = vmatpush1.bf16.msra.mxu0 0
    %1592 = vmatprep.subr.bf16.mxu0 0
    %1593 = vmatpush1.bf16.msra.mxu0 0
    %1594 = vmatprep.subr.bf16.mxu0 0
    %1595 = vmatpush1.bf16.msra.mxu0 0
    %1596 = vmatprep.subr.bf16.mxu0 0
    %1597 = vmatpush1.bf16.msra.mxu0 0
    %1598 = vmatprep.subr.bf16.mxu0 0
    %1599 = vmatpush1.bf16.msra.mxu0 0
    %1600 = vmatprep.subr.bf16.mxu0 0
    %1601 = vmatpush1.bf16.msra.mxu0 0
    %1602 = vmatprep.subr.bf16.mxu0 0
    %1603 = vmatpush1.bf16.msra.mxu0 0
    %1604 = vmatprep.subr.bf16.mxu0 0
    %1605 = vmatpush1.bf16.msra.mxu0 0
    %1606 = vmatprep.subr.bf16.mxu0 0
    %1607 = vmatpush1.bf16.msra.mxu0 0
    %1608 = vmatprep.subr.bf16.mxu0 0
    %1609 = vmatpush1.bf16.msra.mxu0 0
    %1610 = vmatprep.subr.bf16.mxu0 0
    %1611 = vmatpush1.bf16.msra.mxu0 0
    %1612 = vmatprep.mubr.bf16.mxu0 0
    %1613 = vmatmul.mubr.bf16.gmra.mrb[0].mxu0 %v1575
    %v1614 = vpop.f32.mrb[0].mxu0
    %v1615 = vadd.f32 %v1561, %v1614
    %v1616 = vpop.f32.mrb[0].mxu0
    %v1617 = vpop.f32.mrb[0].mxu0
    %v1618 = vadd.f32 %v1564, %v1617
    %v1619 = vpop.f32.mrb[0].mxu0
    %1620 = vmatprep.mubr.bf16.mxu0 0
    %1621 = vmatmul.mubr.bf16.gmra.mrb[0].mxu0 %v1578
    %v1622 = vpop.f32.mrb[0].mxu0
    %v1623 = vadd.f32 %v1569, %v1622
    %v1624 = vpop.f32.mrb[0].mxu0
    %v1625 = vpop.f32.mrb[0].mxu0
    %v1626 = vadd.f32 %v1572, %v1625
    %v1627 = vpop.f32.mrb[0].mxu0
    %1628 = vdwg.mxu0
    %vm1629 = vcmp.eq.s32.totalorder %v1508, %v621
    %vm1630 = vcmp.eq.s32.totalorder %v1509, %v621
    %v1631 = vsel %vm1629, 1.0, 0.0
    %v1632 = vsel %vm1630, 1.0, 0.0
    %v1633 = vpack.c.bf16 %v1632, %v1631
    %v1634 = vsel %vm1520, %v1114, 0
    %v1637 = vsel %vm1520, %v1633, 0
    %1639 = vmatprep.subr.bf16.mxu0 0
    %1640 = vmatpush1.bf16.msra.mxu0 %v1506
    %1641 = vmatprep.subr.bf16.mxu0 0
    %1642 = vmatpush1.bf16.msra.mxu0 0
    %1643 = vmatprep.subr.bf16.mxu0 0
    %1644 = vmatpush1.bf16.msra.mxu0 0
    %1645 = vmatprep.subr.bf16.mxu0 0
    %1646 = vmatpush1.bf16.msra.mxu0 0
    %1647 = vmatprep.subr.bf16.mxu0 0
    %1648 = vmatpush1.bf16.msra.mxu0 0
    %1649 = vmatprep.subr.bf16.mxu0 0
    %1650 = vmatpush1.bf16.msra.mxu0 0
    %1651 = vmatprep.subr.bf16.mxu0 0
    %1652 = vmatpush1.bf16.msra.mxu0 0
    %1653 = vmatprep.subr.bf16.mxu0 0
    %1654 = vmatpush1.bf16.msra.mxu0 0
    %1655 = vmatprep.subr.bf16.mxu0 0
    %1656 = vmatpush1.bf16.msra.mxu0 0
    %1657 = vmatprep.subr.bf16.mxu0 0
    %1658 = vmatpush1.bf16.msra.mxu0 0
    %1659 = vmatprep.subr.bf16.mxu0 0
    %1660 = vmatpush1.bf16.msra.mxu0 0
    %1661 = vmatprep.subr.bf16.mxu0 0
    %1662 = vmatpush1.bf16.msra.mxu0 0
    %1663 = vmatprep.subr.bf16.mxu0 0
    %1664 = vmatpush1.bf16.msra.mxu0 0
    %1665 = vmatprep.subr.bf16.mxu0 0
    %1666 = vmatpush1.bf16.msra.mxu0 0
    %1667 = vmatprep.subr.bf16.mxu0 0
    %1668 = vmatpush1.bf16.msra.mxu0 0
    %1669 = vmatprep.subr.bf16.mxu0 0
    %1670 = vmatpush1.bf16.msra.mxu0 0
    %1671 = vmatprep.mubr.bf16.mxu0 0
    %1672 = vmatmul.mubr.bf16.gmra.mrb[0].mxu0 %v1634
    %v1673 = vpop.f32.mrb[0].mxu0
    %v1674 = vadd.f32 0.0, %v1673
    %v1675 = vpop.f32.mrb[0].mxu0
    %v1676 = vpop.f32.mrb[0].mxu0
    %v1677 = vadd.f32 0.0, %v1676
    %v1678 = vpop.f32.mrb[0].mxu0
    %1679 = vmatprep.mubr.bf16.mxu0 0
    %1680 = vmatmul.mubr.bf16.gmra.mrb[0].mxu0 %v1637
    %v1681 = vpop.f32.mrb[0].mxu0
    %v1682 = vadd.f32 0.0, %v1681
    %v1683 = vpop.f32.mrb[0].mxu0
    %v1684 = vpop.f32.mrb[0].mxu0
    %v1685 = vadd.f32 0.0, %v1684
    %v1686 = vpop.f32.mrb[0].mxu0
    %1687 = vdwg.mxu0
    %v1688 = vadd.f32 %v1615, %v1674
    %v1689 = vadd.f32 %v1618, %v1677
    %v1690 = vadd.f32 %v1623, %v1682
    %v1691 = vadd.f32 %v1626, %v1685
    %vm1692 = vcmp.eq.s32.totalorder %v1508, %v672
    %vm1693 = vcmp.eq.s32.totalorder %v1509, %v672
    %v1694 = vsel %vm1692, 1.0, 0.0
    %v1695 = vsel %vm1693, 1.0, 0.0
    %v1696 = vpack.c.bf16 %v1695, %v1694
    %v1697 = vsel %vm1520, %v1166, 0
    %v1700 = vsel %vm1520, %v1696, 0
    %1702 = vmatprep.subr.bf16.mxu0 0
    %1703 = vmatpush1.bf16.msra.mxu0 %v1507
    %1704 = vmatprep.subr.bf16.mxu0 0
    %1705 = vmatpush1.bf16.msra.mxu0 0
    %1706 = vmatprep.subr.bf16.mxu0 0
    %1707 = vmatpush1.bf16.msra.mxu0 0
    %1708 = vmatprep.subr.bf16.mxu0 0
    %1709 = vmatpush1.bf16.msra.mxu0 0
    %1710 = vmatprep.subr.bf16.mxu0 0
    %1711 = vmatpush1.bf16.msra.mxu0 0
    %1712 = vmatprep.subr.bf16.mxu0 0
    %1713 = vmatpush1.bf16.msra.mxu0 0
    %1714 = vmatprep.subr.bf16.mxu0 0
    %1715 = vmatpush1.bf16.msra.mxu0 0
    %1716 = vmatprep.subr.bf16.mxu0 0
    %1717 = vmatpush1.bf16.msra.mxu0 0
    %1718 = vmatprep.subr.bf16.mxu0 0
    %1719 = vmatpush1.bf16.msra.mxu0 0
    %1720 = vmatprep.subr.bf16.mxu0 0
    %1721 = vmatpush1.bf16.msra.mxu0 0
    %1722 = vmatprep.subr.bf16.mxu0 0
    %1723 = vmatpush1.bf16.msra.mxu0 0
    %1724 = vmatprep.subr.bf16.mxu0 0
    %1725 = vmatpush1.bf16.msra.mxu0 0
    %1726 = vmatprep.subr.bf16.mxu0 0
    %1727 = vmatpush1.bf16.msra.mxu0 0
    %1728 = vmatprep.subr.bf16.mxu0 0
    %1729 = vmatpush1.bf16.msra.mxu0 0
    %1730 = vmatprep.subr.bf16.mxu0 0
    %1731 = vmatpush1.bf16.msra.mxu0 0
    %1732 = vmatprep.subr.bf16.mxu0 0
    %1733 = vmatpush1.bf16.msra.mxu0 0
    %1734 = vmatprep.mubr.bf16.mxu0 0
    %1735 = vmatmul.mubr.bf16.gmra.mrb[0].mxu0 %v1697
    %v1736 = vpop.f32.mrb[0].mxu0
    %v1737 = vadd.f32 0.0, %v1736
    %v1738 = vpop.f32.mrb[0].mxu0
    %v1739 = vpop.f32.mrb[0].mxu0
    %v1740 = vadd.f32 0.0, %v1739
    %v1741 = vpop.f32.mrb[0].mxu0
    %1742 = vmatprep.mubr.bf16.mxu0 0
    %1743 = vmatmul.mubr.bf16.gmra.mrb[0].mxu0 %v1700
    %v1744 = vpop.f32.mrb[0].mxu0
    %v1745 = vadd.f32 0.0, %v1744
    %v1746 = vpop.f32.mrb[0].mxu0
    %v1747 = vpop.f32.mrb[0].mxu0
    %v1748 = vadd.f32 0.0, %v1747
    %v1749 = vpop.f32.mrb[0].mxu0
    %1750 = vdwg.mxu0
    %v1751 = vadd.f32 %v1688, %v1737
    %v1752 = vadd.f32 %v1689, %v1740
    %v1753 = vadd.f32 %v1690, %v1745
    %v1754 = vadd.f32 %v1691, %v1748
    %v1755 = vld [vmem:[#allocation5 + $0x5] sm:$0x1]
    %v1756 = vlaneseq
    %v1757 = vshrl.u32 %v1756, 7
    %v1758 = vsub.s32 0, %v1757
    %v1759 = vrot.slane %v1755, %v1758
    %v1760 = vadd.f32 %v1751, %v1759
    %v1761 = vadd.f32 %v1752, %v1759
    %v1762 = vadd.f32 %v1753, %v1759
    %v1763 = vadd.f32 %v1754, %v1759
    %v1764 = vmax.f32 %v1760, 0.0
    %v1765 = vmax.f32 %v1761, 0.0
    %v1766 = vmax.f32 %v1762, 0.0
    %v1767 = vmax.f32 %v1763, 0.0
    %v1768 = vld [vmem:[#allocation2 + $0x400] sm:$0xff]
    %v1769 = vld [vmem:[#allocation2 + $0x408] sm:$0xff]
    %v1770 = vld [vmem:[#allocation2 + $0x410] sm:$0xff]
    %v1771 = vld [vmem:[#allocation2 + $0x418] sm:$0xff]
    %v1772 = vld [vmem:[#allocation2 + $0x420] sm:$0xff]
    %v1773 = vld [vmem:[#allocation2 + $0x428] sm:$0xff]
    %v1774 = vld [vmem:[#allocation2 + $0x430] sm:$0xff]
    %v1775 = vld [vmem:[#allocation2 + $0x438] sm:$0xff]
    %v1776 = vld [vmem:[#allocation2 + $0x440] sm:$0xff]
    %v1777 = vld [vmem:[#allocation2 + $0x448] sm:$0xff]
    %v1778 = vld [vmem:[#allocation2 + $0x450] sm:$0xff]
    %v1779 = vld [vmem:[#allocation2 + $0x458] sm:$0xff]
    %v1780 = vld [vmem:[#allocation2 + $0x460] sm:$0xff]
    %v1781 = vld [vmem:[#allocation2 + $0x468] sm:$0xff]
    %v1782 = vld [vmem:[#allocation2 + $0x470] sm:$0xff]
    %v1783 = vld [vmem:[#allocation2 + $0x478] sm:$0xff]
    %v1784 = vld [vmem:[#allocation2 + $0x480] sm:$0xff]
    %v1785 = vld [vmem:[#allocation2 + $0x488] sm:$0xff]
    %v1786 = vld [vmem:[#allocation2 + $0x490] sm:$0xff]
    %v1787 = vld [vmem:[#allocation2 + $0x498] sm:$0xff]
    %v1788 = vld [vmem:[#allocation2 + $0x4a0] sm:$0xff]
    %v1789 = vld [vmem:[#allocation2 + $0x4a8] sm:$0xff]
    %v1790 = vld [vmem:[#allocation2 + $0x4b0] sm:$0xff]
    %v1791 = vld [vmem:[#allocation2 + $0x4b8] sm:$0xff]
    %v1792 = vld [vmem:[#allocation2 + $0x4c0] sm:$0xff]
    %v1793 = vld [vmem:[#allocation2 + $0x4c8] sm:$0xff]
    %v1794 = vld [vmem:[#allocation2 + $0x4d0] sm:$0xff]
    %v1795 = vld [vmem:[#allocation2 + $0x4d8] sm:$0xff]
    %v1796 = vld [vmem:[#allocation2 + $0x4e0] sm:$0xff]
    %v1797 = vld [vmem:[#allocation2 + $0x4e8] sm:$0xff]
    %v1798 = vld [vmem:[#allocation2 + $0x4f0] sm:$0xff]
    %v1799 = vld [vmem:[#allocation2 + $0x4f8] sm:$0xff]
    %v1800 = vpack.c.bf16 %v1765, %v1764
    %v1801 = vpack.c.bf16 %v1767, %v1766
    %v1834 = vunpack.c.l.b16 %v1768
    %v1835 = vunpack.c.h.b16 %v1768
    %v1836 = vunpack.c.l.b16 %v1769
    %v1837 = vunpack.c.h.b16 %v1769
    %v1838 = vunpack.c.l.b16 %v1770
    %v1839 = vunpack.c.h.b16 %v1770
    %v1840 = vunpack.c.l.b16 %v1771
    %v1841 = vunpack.c.h.b16 %v1771
    %v1842 = vunpack.c.l.b16 %v1772
    %v1843 = vunpack.c.h.b16 %v1772
    %v1844 = vunpack.c.l.b16 %v1773
    %v1845 = vunpack.c.h.b16 %v1773
    %v1846 = vunpack.c.l.b16 %v1774
    %v1847 = vunpack.c.h.b16 %v1774
    %v1848 = vunpack.c.l.b16 %v1775
    %v1849 = vunpack.c.h.b16 %v1775
    %v1850 = vunpack.c.l.b16 %v1776
    %v1851 = vunpack.c.h.b16 %v1776
    %v1852 = vunpack.c.l.b16 %v1777
    %v1853 = vunpack.c.h.b16 %v1777
    %v1854 = vunpack.c.l.b16 %v1778
    %v1855 = vunpack.c.h.b16 %v1778
    %v1856 = vunpack.c.l.b16 %v1779
    %v1857 = vunpack.c.h.b16 %v1779
    %v1858 = vunpack.c.l.b16 %v1780
    %v1859 = vunpack.c.h.b16 %v1780
    %v1860 = vunpack.c.l.b16 %v1781
    %v1861 = vunpack.c.h.b16 %v1781
    %v1862 = vunpack.c.l.b16 %v1782
    %v1863 = vunpack.c.h.b16 %v1782
    %v1864 = vunpack.c.l.b16 %v1783
    %v1865 = vunpack.c.h.b16 %v1783
    %v1866 = vunpack.c.l.b16 %v1784
    %v1867 = vunpack.c.h.b16 %v1784
    %v1868 = vunpack.c.l.b16 %v1785
    %v1869 = vunpack.c.h.b16 %v1785
    %v1870 = vunpack.c.l.b16 %v1786
    %v1871 = vunpack.c.h.b16 %v1786
    %v1872 = vunpack.c.l.b16 %v1787
    %v1873 = vunpack.c.h.b16 %v1787
    %v1874 = vunpack.c.l.b16 %v1788
    %v1875 = vunpack.c.h.b16 %v1788
    %v1876 = vunpack.c.l.b16 %v1789
    %v1877 = vunpack.c.h.b16 %v1789
    %v1878 = vunpack.c.l.b16 %v1790
    %v1879 = vunpack.c.h.b16 %v1790
    %v1880 = vunpack.c.l.b16 %v1791
    %v1881 = vunpack.c.h.b16 %v1791
    %v1882 = vunpack.c.l.b16 %v1792
    %v1883 = vunpack.c.h.b16 %v1792
    %v1884 = vunpack.c.l.b16 %v1793
    %v1885 = vunpack.c.h.b16 %v1793
    %v1886 = vunpack.c.l.b16 %v1794
    %v1887 = vunpack.c.h.b16 %v1794
    %v1888 = vunpack.c.l.b16 %v1795
    %v1889 = vunpack.c.h.b16 %v1795
    %v1890 = vunpack.c.l.b16 %v1796
    %v1891 = vunpack.c.h.b16 %v1796
    %v1892 = vunpack.c.l.b16 %v1797
    %v1893 = vunpack.c.h.b16 %v1797
    %v1894 = vunpack.c.l.b16 %v1798
    %v1895 = vunpack.c.h.b16 %v1798
    %v1896 = vunpack.c.l.b16 %v1799
    %v1897 = vunpack.c.h.b16 %v1799
    %v1898 = vpack.c.b16 %v1838, %v1834
    %v1899 = vpack.c.b16 %v1839, %v1835
    %v1900 = vpack.c.b16 %v1840, %v1836
    %v1901 = vpack.c.b16 %v1841, %v1837
    %v1902 = vpack.c.b16 %v1846, %v1842
    %v1903 = vpack.c.b16 %v1847, %v1843
    %v1904 = vpack.c.b16 %v1848, %v1844
    %v1905 = vpack.c.b16 %v1849, %v1845
    %v1906 = vpack.c.b16 %v1854, %v1850
    %v1907 = vpack.c.b16 %v1855, %v1851
    %v1908 = vpack.c.b16 %v1856, %v1852
    %v1909 = vpack.c.b16 %v1857, %v1853
    %v1910 = vpack.c.b16 %v1862, %v1858
    %v1911 = vpack.c.b16 %v1863, %v1859
    %v1912 = vpack.c.b16 %v1864, %v1860
    %v1913 = vpack.c.b16 %v1865, %v1861
    %v1914 = vpack.c.b16 %v1870, %v1866
    %v1915 = vpack.c.b16 %v1871, %v1867
    %v1916 = vpack.c.b16 %v1872, %v1868
    %v1917 = vpack.c.b16 %v1873, %v1869
    %v1918 = vpack.c.b16 %v1878, %v1874
    %v1919 = vpack.c.b16 %v1879, %v1875
    %v1920 = vpack.c.b16 %v1880, %v1876
    %v1921 = vpack.c.b16 %v1881, %v1877
    %v1922 = vpack.c.b16 %v1886, %v1882
    %v1923 = vpack.c.b16 %v1887, %v1883
    %v1924 = vpack.c.b16 %v1888, %v1884
    %v1925 = vpack.c.b16 %v1889, %v1885
    %v1926 = vpack.c.b16 %v1894, %v1890
    %v1927 = vpack.c.b16 %v1895, %v1891
    %v1928 = vpack.c.b16 %v1896, %v1892
    %v1929 = vpack.c.b16 %v1897, %v1893
    %1962 = vmatprep.subr.bf16.mxu0 %v1899
    %1963 = vmatpush1.bf16.msra.mxu0 %v1898
    %1964 = vmatprep.subr.bf16.mxu0 %v1903
    %1965 = vmatpush1.bf16.msra.mxu0 %v1902
    %1966 = vmatprep.subr.bf16.mxu0 %v1907
    %1967 = vmatpush1.bf16.msra.mxu0 %v1906
    %1968 = vmatprep.subr.bf16.mxu0 %v1911
    %1969 = vmatpush1.bf16.msra.mxu0 %v1910
    %1970 = vmatprep.subr.bf16.mxu0 %v1915
    %1971 = vmatpush1.bf16.msra.mxu0 %v1914
    %1972 = vmatprep.subr.bf16.mxu0 %v1919
    %1973 = vmatpush1.bf16.msra.mxu0 %v1918
    %1974 = vmatprep.subr.bf16.mxu0 %v1923
    %1975 = vmatpush1.bf16.msra.mxu0 %v1922
    %1976 = vmatprep.subr.bf16.mxu0 %v1927
    %1977 = vmatpush1.bf16.msra.mxu0 %v1926
    %1978 = vmatprep.subr.bf16.mxu0 0
    %1979 = vmatpush1.bf16.msra.mxu0 0
    %1980 = vmatprep.subr.bf16.mxu0 0
    %1981 = vmatpush1.bf16.msra.mxu0 0
    %1982 = vmatprep.subr.bf16.mxu0 0
    %1983 = vmatpush1.bf16.msra.mxu0 0
    %1984 = vmatprep.subr.bf16.mxu0 0
    %1985 = vmatpush1.bf16.msra.mxu0 0
    %1986 = vmatprep.subr.bf16.mxu0 0
    %1987 = vmatpush1.bf16.msra.mxu0 0
    %1988 = vmatprep.subr.bf16.mxu0 0
    %1989 = vmatpush1.bf16.msra.mxu0 0
    %1990 = vmatprep.subr.bf16.mxu0 0
    %1991 = vmatpush1.bf16.msra.mxu0 0
    %1992 = vmatprep.subr.bf16.mxu0 0
    %1993 = vmatpush1.bf16.msra.mxu0 0
    %1994 = vmatprep.mubr.bf16.mxu0 0
    %1995 = vmatmul.mubr.bf16.gmra.mrb[0].mxu0 %v1800
    %v1996 = vpop.f32.mrb[0].mxu0
    %v1997 = vadd.f32 0.0, %v1996
    %v1998 = vpop.f32.mrb[0].mxu0
    %v1999 = vadd.f32 0.0, %v1998
    %v2000 = vpop.f32.mrb[0].mxu0
    %v2001 = vadd.f32 0.0, %v2000
    %v2002 = vpop.f32.mrb[0].mxu0
    %v2003 = vadd.f32 0.0, %v2002
    %2004 = vmatprep.mubr.bf16.mxu0 0
    %2005 = vmatmul.mubr.bf16.gmra.mrb[0].mxu0 %v1801
    %v2006 = vpop.f32.mrb[0].mxu0
    %v2007 = vadd.f32 0.0, %v2006
    %v2008 = vpop.f32.mrb[0].mxu0
    %v2009 = vadd.f32 0.0, %v2008
    %v2010 = vpop.f32.mrb[0].mxu0
    %v2011 = vadd.f32 0.0, %v2010
    %v2012 = vpop.f32.mrb[0].mxu0
    %v2013 = vadd.f32 0.0, %v2012
    %2014 = vdwg.mxu0
    %2015 = vmatprep.subr.bf16.mxu0 %v1901
    %2016 = vmatpush1.bf16.msra.mxu0 %v1900
    %2017 = vmatprep.subr.bf16.mxu0 %v1905
    %2018 = vmatpush1.bf16.msra.mxu0 %v1904
    %2019 = vmatprep.subr.bf16.mxu0 %v1909
    %2020 = vmatpush1.bf16.msra.mxu0 %v1908
    %2021 = vmatprep.subr.bf16.mxu0 %v1913
    %2022 = vmatpush1.bf16.msra.mxu0 %v1912
    %2023 = vmatprep.subr.bf16.mxu0 %v1917
    %2024 = vmatpush1.bf16.msra.mxu0 %v1916
    %2025 = vmatprep.subr.bf16.mxu0 %v1921
    %2026 = vmatpush1.bf16.msra.mxu0 %v1920
    %2027 = vmatprep.subr.bf16.mxu0 %v1925
    %2028 = vmatpush1.bf16.msra.mxu0 %v1924
    %2029 = vmatprep.subr.bf16.mxu0 %v1929
    %2030 = vmatpush1.bf16.msra.mxu0 %v1928
    %2031 = vmatprep.subr.bf16.mxu0 0
    %2032 = vmatpush1.bf16.msra.mxu0 0
    %2033 = vmatprep.subr.bf16.mxu0 0
    %2034 = vmatpush1.bf16.msra.mxu0 0
    %2035 = vmatprep.subr.bf16.mxu0 0
    %2036 = vmatpush1.bf16.msra.mxu0 0
    %2037 = vmatprep.subr.bf16.mxu0 0
    %2038 = vmatpush1.bf16.msra.mxu0 0
    %2039 = vmatprep.subr.bf16.mxu0 0
    %2040 = vmatpush1.bf16.msra.mxu0 0
    %2041 = vmatprep.subr.bf16.mxu0 0
    %2042 = vmatpush1.bf16.msra.mxu0 0
    %2043 = vmatprep.subr.bf16.mxu0 0
    %2044 = vmatpush1.bf16.msra.mxu0 0
    %2045 = vmatprep.subr.bf16.mxu0 0
    %2046 = vmatpush1.bf16.msra.mxu0 0
    %2047 = vmatprep.mubr.bf16.mxu0 0
    %2048 = vmatmul.mubr.bf16.gmra.mrb[0].mxu0 %v1800
    %v2049 = vpop.f32.mrb[0].mxu0
    %v2050 = vadd.f32 0.0, %v2049
    %v2051 = vpop.f32.mrb[0].mxu0
    %v2052 = vadd.f32 0.0, %v2051
    %v2053 = vpop.f32.mrb[0].mxu0
    %v2054 = vadd.f32 0.0, %v2053
    %v2055 = vpop.f32.mrb[0].mxu0
    %v2056 = vadd.f32 0.0, %v2055
    %2057 = vmatprep.mubr.bf16.mxu0 0
    %2058 = vmatmul.mubr.bf16.gmra.mrb[0].mxu0 %v1801
    %v2059 = vpop.f32.mrb[0].mxu0
    %v2060 = vadd.f32 0.0, %v2059
    %v2061 = vpop.f32.mrb[0].mxu0
    %v2062 = vadd.f32 0.0, %v2061
    %v2063 = vpop.f32.mrb[0].mxu0
    %v2064 = vadd.f32 0.0, %v2063
    %v2065 = vpop.f32.mrb[0].mxu0
    %v2066 = vadd.f32 0.0, %v2065
    %2067 = vdwg.mxu0
    %v2068 = vpack.c.bf16 %v2001, %v1997
    %v2069 = vpack.c.bf16 %v2003, %v1999
    %v2070 = vpack.c.bf16 %v2054, %v2050
    %v2071 = vpack.c.bf16 %v2056, %v2052
    %v2072 = vpack.c.bf16 %v2011, %v2007
    %v2073 = vpack.c.bf16 %v2013, %v2009
    %v2074 = vpack.c.bf16 %v2064, %v2060
    %v2075 = vpack.c.bf16 %v2066, %v2062
    %v2076 = vadd.s32 %v201, 32
    %v2077 = vadd.s32 %v201, 40
    %v2078 = vadd.s32 %v201, 48
    %v2079 = vadd.s32 %v201, 56
    %vm2080 = vcmp.eq.s32.totalorder %v2076, %v520
    %vm2081 = vcmp.eq.s32.totalorder %v2077, %v520
    %vm2082 = vcmp.eq.s32.totalorder %v2078, %v520
    %vm2083 = vcmp.eq.s32.totalorder %v2079, %v520
    %v2084 = vsel %vm2080, 1.0, 0.0
    %v2085 = vsel %vm2081, 1.0, 0.0
    %v2086 = vsel %vm2082, 1.0, 0.0
    %v2087 = vsel %vm2083, 1.0, 0.0
    %v2088 = vpack.c.bf16 %v2085, %v2084
    %v2089 = vpack.c.bf16 %v2087, %v2086
    %vm2090 = vcmp.eq.s32.totalorder %v2076, %v519
    %vm2091 = vcmp.eq.s32.totalorder %v2077, %v519
    %vm2092 = vcmp.eq.s32.totalorder %v2078, %v519
    %vm2093 = vcmp.eq.s32.totalorder %v2079, %v519
    %v2094 = vsel %vm2090, 1.0, 0.0
    %v2095 = vsel %vm2091, 1.0, 0.0
    %v2096 = vsel %vm2092, 1.0, 0.0
    %v2097 = vsel %vm2093, 1.0, 0.0
    %v2098 = vpack.c.bf16 %v2095, %v2094
    %v2099 = vpack.c.bf16 %v2097, %v2096
    %v2100 = vsel %vm114, %v1015, 0
    %v2102 = vsel %vm114, %v1519, 0
    %v2105 = vsel %vm114, %v2098, 0
    %v2108 = vsel %vm114, %v2099, 0
    %2110 = vmatprep.subr.bf16.mxu0 0
    %2111 = vmatpush1.bf16.msra.mxu0 %v2069
    %2112 = vmatprep.subr.bf16.mxu0 0
    %2113 = vmatpush1.bf16.msra.mxu0 %v2073
    %2114 = vmatprep.subr.bf16.mxu0 0
    %2115 = vmatpush1.bf16.msra.mxu0 0
    %2116 = vmatprep.subr.bf16.mxu0 0
    %2117 = vmatpush1.bf16.msra.mxu0 0
    %2118 = vmatprep.subr.bf16.mxu0 0
    %2119 = vmatpush1.bf16.msra.mxu0 0
    %2120 = vmatprep.subr.bf16.mxu0 0
    %2121 = vmatpush1.bf16.msra.mxu0 0
    %2122 = vmatprep.subr.bf16.mxu0 0
    %2123 = vmatpush1.bf16.msra.mxu0 0
    %2124 = vmatprep.subr.bf16.mxu0 0
    %2125 = vmatpush1.bf16.msra.mxu0 0
    %2126 = vmatprep.subr.bf16.mxu0 0
    %2127 = vmatpush1.bf16.msra.mxu0 0
    %2128 = vmatprep.subr.bf16.mxu0 0
    %2129 = vmatpush1.bf16.msra.mxu0 0
    %2130 = vmatprep.subr.bf16.mxu0 0
    %2131 = vmatpush1.bf16.msra.mxu0 0
    %2132 = vmatprep.subr.bf16.mxu0 0
    %2133 = vmatpush1.bf16.msra.mxu0 0
    %2134 = vmatprep.subr.bf16.mxu0 0
    %2135 = vmatpush1.bf16.msra.mxu0 0
    %2136 = vmatprep.subr.bf16.mxu0 0
    %2137 = vmatpush1.bf16.msra.mxu0 0
    %2138 = vmatprep.subr.bf16.mxu0 0
    %2139 = vmatpush1.bf16.msra.mxu0 0
    %2140 = vmatprep.subr.bf16.mxu0 0
    %2141 = vmatpush1.bf16.msra.mxu0 0
    %2142 = vmatprep.mubr.bf16.mxu0 0
    %2143 = vmatmul.mubr.bf16.gmra.mrb[0].mxu0 %v2100
    %v2144 = vpop.f32.mrb[0].mxu0
    %v2145 = vadd.f32 0.0, %v2144
    %v2146 = vpop.f32.mrb[0].mxu0
    %v2147 = vpop.f32.mrb[0].mxu0
    %v2148 = vadd.f32 0.0, %v2147
    %v2149 = vpop.f32.mrb[0].mxu0
    %2150 = vmatprep.mubr.bf16.mxu0 0
    %2151 = vmatmul.mubr.bf16.gmra.mrb[0].mxu0 %v2102
    %v2152 = vpop.f32.mrb[0].mxu0
    %v2153 = vadd.f32 0.0, %v2152
    %v2154 = vpop.f32.mrb[0].mxu0
    %v2155 = vpop.f32.mrb[0].mxu0
    %v2156 = vadd.f32 0.0, %v2155
    %v2157 = vpop.f32.mrb[0].mxu0
    %2158 = vmatprep.mubr.bf16.mxu0 0
    %2159 = vmatmul.mubr.bf16.gmra.mrb[0].mxu0 %v2105
    %v2160 = vpop.f32.mrb[0].mxu0
    %v2161 = vadd.f32 0.0, %v2160
    %v2162 = vpop.f32.mrb[0].mxu0
    %v2163 = vpop.f32.mrb[0].mxu0
    %v2164 = vadd.f32 0.0, %v2163
    %v2165 = vpop.f32.mrb[0].mxu0
    %2166 = vmatprep.mubr.bf16.mxu0 0
    %2167 = vmatmul.mubr.bf16.gmra.mrb[0].mxu0 %v2108
    %v2168 = vpop.f32.mrb[0].mxu0
    %v2169 = vadd.f32 0.0, %v2168
    %v2170 = vpop.f32.mrb[0].mxu0
    %v2171 = vpop.f32.mrb[0].mxu0
    %v2172 = vadd.f32 0.0, %v2171
    %v2173 = vpop.f32.mrb[0].mxu0
    %2174 = vdwg.mxu0
    %v2175 = vsel %vm114, %v1012, 0
    %v2177 = vsel %vm114, %v1514, 0
    %v2180 = vsel %vm114, %v2088, 0
    %v2183 = vsel %vm114, %v2089, 0
    %2185 = vmatprep.subr.bf16.mxu0 0
    %2186 = vmatpush1.bf16.msra.mxu0 %v2068
    %2187 = vmatprep.subr.bf16.mxu0 0
    %2188 = vmatpush1.bf16.msra.mxu0 %v2072
    %2189 = vmatprep.subr.bf16.mxu0 0
    %2190 = vmatpush1.bf16.msra.mxu0 0
    %2191 = vmatprep.subr.bf16.mxu0 0
    %2192 = vmatpush1.bf16.msra.mxu0 0
    %2193 = vmatprep.subr.bf16.mxu0 0
    %2194 = vmatpush1.bf16.msra.mxu0 0
    %2195 = vmatprep.subr.bf16.mxu0 0
    %2196 = vmatpush1.bf16.msra.mxu0 0
    %2197 = vmatprep.subr.bf16.mxu0 0
    %2198 = vmatpush1.bf16.msra.mxu0 0
    %2199 = vmatprep.subr.bf16.mxu0 0
    %2200 = vmatpush1.bf16.msra.mxu0 0
    %2201 = vmatprep.subr.bf16.mxu0 0
    %2202 = vmatpush1.bf16.msra.mxu0 0
    %2203 = vmatprep.subr.bf16.mxu0 0
    %2204 = vmatpush1.bf16.msra.mxu0 0
    %2205 = vmatprep.subr.bf16.mxu0 0
    %2206 = vmatpush1.bf16.msra.mxu0 0
    %2207 = vmatprep.subr.bf16.mxu0 0
    %2208 = vmatpush1.bf16.msra.mxu0 0
    %2209 = vmatprep.subr.bf16.mxu0 0
    %2210 = vmatpush1.bf16.msra.mxu0 0
    %2211 = vmatprep.subr.bf16.mxu0 0
    %2212 = vmatpush1.bf16.msra.mxu0 0
    %2213 = vmatprep.subr.bf16.mxu0 0
    %2214 = vmatpush1.bf16.msra.mxu0 0
    %2215 = vmatprep.subr.bf16.mxu0 0
    %2216 = vmatpush1.bf16.msra.mxu0 0
    %2217 = vmatprep.mubr.bf16.mxu0 0
    %2218 = vmatmul.mubr.bf16.gmra.mrb[0].mxu0 %v2175
    %v2219 = vpop.f32.mrb[0].mxu0
    %v2220 = vadd.f32 %v2145, %v2219
    %v2221 = vpop.f32.mrb[0].mxu0
    %v2222 = vpop.f32.mrb[0].mxu0
    %v2223 = vadd.f32 %v2148, %v2222
    %v2224 = vpop.f32.mrb[0].mxu0
    %2225 = vmatprep.mubr.bf16.mxu0 0
    %2226 = vmatmul.mubr.bf16.gmra.mrb[0].mxu0 %v2177
    %v2227 = vpop.f32.mrb[0].mxu0
    %v2228 = vadd.f32 %v2153, %v2227
    %v2229 = vpop.f32.mrb[0].mxu0
    %v2230 = vpop.f32.mrb[0].mxu0
    %v2231 = vadd.f32 %v2156, %v2230
    %v2232 = vpop.f32.mrb[0].mxu0
    %2233 = vmatprep.mubr.bf16.mxu0 0
    %2234 = vmatmul.mubr.bf16.gmra.mrb[0].mxu0 %v2180
    %v2235 = vpop.f32.mrb[0].mxu0
    %v2236 = vadd.f32 %v2161, %v2235
    %v2237 = vpop.f32.mrb[0].mxu0
    %v2238 = vpop.f32.mrb[0].mxu0
    %v2239 = vadd.f32 %v2164, %v2238
    %v2240 = vpop.f32.mrb[0].mxu0
    %2241 = vmatprep.mubr.bf16.mxu0 0
    %2242 = vmatmul.mubr.bf16.gmra.mrb[0].mxu0 %v2183
    %v2243 = vpop.f32.mrb[0].mxu0
    %v2244 = vadd.f32 %v2169, %v2243
    %v2245 = vpop.f32.mrb[0].mxu0
    %v2246 = vpop.f32.mrb[0].mxu0
    %v2247 = vadd.f32 %v2172, %v2246
    %v2248 = vpop.f32.mrb[0].mxu0
    %2249 = vdwg.mxu0
    %vm2250 = vcmp.eq.s32.totalorder %v2076, %v621
    %vm2251 = vcmp.eq.s32.totalorder %v2077, %v621
    %vm2252 = vcmp.eq.s32.totalorder %v2078, %v621
    %vm2253 = vcmp.eq.s32.totalorder %v2079, %v621
    %v2254 = vsel %vm2250, 1.0, 0.0
    %v2255 = vsel %vm2251, 1.0, 0.0
    %v2256 = vsel %vm2252, 1.0, 0.0
    %v2257 = vsel %vm2253, 1.0, 0.0
    %v2258 = vpack.c.bf16 %v2255, %v2254
    %v2259 = vpack.c.bf16 %v2257, %v2256
    %v2260 = vsel %vm114, %v1114, 0
    %v2262 = vsel %vm114, %v1633, 0
    %v2265 = vsel %vm114, %v2258, 0
    %v2268 = vsel %vm114, %v2259, 0
    %2270 = vmatprep.subr.bf16.mxu0 0
    %2271 = vmatpush1.bf16.msra.mxu0 %v2070
    %2272 = vmatprep.subr.bf16.mxu0 0
    %2273 = vmatpush1.bf16.msra.mxu0 %v2074
    %2274 = vmatprep.subr.bf16.mxu0 0
    %2275 = vmatpush1.bf16.msra.mxu0 0
    %2276 = vmatprep.subr.bf16.mxu0 0
    %2277 = vmatpush1.bf16.msra.mxu0 0
    %2278 = vmatprep.subr.bf16.mxu0 0
    %2279 = vmatpush1.bf16.msra.mxu0 0
    %2280 = vmatprep.subr.bf16.mxu0 0
    %2281 = vmatpush1.bf16.msra.mxu0 0
    %2282 = vmatprep.subr.bf16.mxu0 0
    %2283 = vmatpush1.bf16.msra.mxu0 0
    %2284 = vmatprep.subr.bf16.mxu0 0
    %2285 = vmatpush1.bf16.msra.mxu0 0
    %2286 = vmatprep.subr.bf16.mxu0 0
    %2287 = vmatpush1.bf16.msra.mxu0 0
    %2288 = vmatprep.subr.bf16.mxu0 0
    %2289 = vmatpush1.bf16.msra.mxu0 0
    %2290 = vmatprep.subr.bf16.mxu0 0
    %2291 = vmatpush1.bf16.msra.mxu0 0
    %2292 = vmatprep.subr.bf16.mxu0 0
    %2293 = vmatpush1.bf16.msra.mxu0 0
    %2294 = vmatprep.subr.bf16.mxu0 0
    %2295 = vmatpush1.bf16.msra.mxu0 0
    %2296 = vmatprep.subr.bf16.mxu0 0
    %2297 = vmatpush1.bf16.msra.mxu0 0
    %2298 = vmatprep.subr.bf16.mxu0 0
    %2299 = vmatpush1.bf16.msra.mxu0 0
    %2300 = vmatprep.subr.bf16.mxu0 0
    %2301 = vmatpush1.bf16.msra.mxu0 0
    %2302 = vmatprep.mubr.bf16.mxu0 0
    %2303 = vmatmul.mubr.bf16.gmra.mrb[0].mxu0 %v2260
    %v2304 = vpop.f32.mrb[0].mxu0
    %v2305 = vadd.f32 0.0, %v2304
    %v2306 = vpop.f32.mrb[0].mxu0
    %v2307 = vpop.f32.mrb[0].mxu0
    %v2308 = vadd.f32 0.0, %v2307
    %v2309 = vpop.f32.mrb[0].mxu0
    %2310 = vmatprep.mubr.bf16.mxu0 0
    %2311 = vmatmul.mubr.bf16.gmra.mrb[0].mxu0 %v2262
    %v2312 = vpop.f32.mrb[0].mxu0
    %v2313 = vadd.f32 0.0, %v2312
    %v2314 = vpop.f32.mrb[0].mxu0
    %v2315 = vpop.f32.mrb[0].mxu0
    %v2316 = vadd.f32 0.0, %v2315
    %v2317 = vpop.f32.mrb[0].mxu0
    %2318 = vmatprep.mubr.bf16.mxu0 0
    %2319 = vmatmul.mubr.bf16.gmra.mrb[0].mxu0 %v2265
    %v2320 = vpop.f32.mrb[0].mxu0
    %v2321 = vadd.f32 0.0, %v2320
    %v2322 = vpop.f32.mrb[0].mxu0
    %v2323 = vpop.f32.mrb[0].mxu0
    %v2324 = vadd.f32 0.0, %v2323
    %v2325 = vpop.f32.mrb[0].mxu0
    %2326 = vmatprep.mubr.bf16.mxu0 0
    %2327 = vmatmul.mubr.bf16.gmra.mrb[0].mxu0 %v2268
    %v2328 = vpop.f32.mrb[0].mxu0
    %v2329 = vadd.f32 0.0, %v2328
    %v2330 = vpop.f32.mrb[0].mxu0
    %v2331 = vpop.f32.mrb[0].mxu0
    %v2332 = vadd.f32 0.0, %v2331
    %v2333 = vpop.f32.mrb[0].mxu0
    %2334 = vdwg.mxu0
    %v2335 = vadd.f32 %v2220, %v2305
    %v2336 = vadd.f32 %v2223, %v2308
    %v2337 = vadd.f32 %v2228, %v2313
    %v2338 = vadd.f32 %v2231, %v2316
    %v2339 = vadd.f32 %v2236, %v2321
    %v2340 = vadd.f32 %v2239, %v2324
    %v2341 = vadd.f32 %v2244, %v2329
    %v2342 = vadd.f32 %v2247, %v2332
    %vm2343 = vcmp.eq.s32.totalorder %v2076, %v672
    %vm2344 = vcmp.eq.s32.totalorder %v2077, %v672
    %vm2345 = vcmp.eq.s32.totalorder %v2078, %v672
    %vm2346 = vcmp.eq.s32.totalorder %v2079, %v672
    %v2347 = vsel %vm2343, 1.0, 0.0
    %v2348 = vsel %vm2344, 1.0, 0.0
    %v2349 = vsel %vm2345, 1.0, 0.0
    %v2350 = vsel %vm2346, 1.0, 0.0
    %v2351 = vpack.c.bf16 %v2348, %v2347
    %v2352 = vpack.c.bf16 %v2350, %v2349
    %v2353 = vsel %vm114, %v1166, 0
    %v2355 = vsel %vm114, %v1696, 0
    %v2358 = vsel %vm114, %v2351, 0
    %v2361 = vsel %vm114, %v2352, 0
    %2363 = vmatprep.subr.bf16.mxu0 0
    %2364 = vmatpush1.bf16.msra.mxu0 %v2071
    %2365 = vmatprep.subr.bf16.mxu0 0
    %2366 = vmatpush1.bf16.msra.mxu0 %v2075
    %2367 = vmatprep.subr.bf16.mxu0 0
    %2368 = vmatpush1.bf16.msra.mxu0 0
    %2369 = vmatprep.subr.bf16.mxu0 0
    %2370 = vmatpush1.bf16.msra.mxu0 0
    %2371 = vmatprep.subr.bf16.mxu0 0
    %2372 = vmatpush1.bf16.msra.mxu0 0
    %2373 = vmatprep.subr.bf16.mxu0 0
    %2374 = vmatpush1.bf16.msra.mxu0 0
    %2375 = vmatprep.subr.bf16.mxu0 0
    %2376 = vmatpush1.bf16.msra.mxu0 0
    %2377 = vmatprep.subr.bf16.mxu0 0
    %2378 = vmatpush1.bf16.msra.mxu0 0
    %2379 = vmatprep.subr.bf16.mxu0 0
    %2380 = vmatpush1.bf16.msra.mxu0 0
    %2381 = vmatprep.subr.bf16.mxu0 0
    %2382 = vmatpush1.bf16.msra.mxu0 0
    %2383 = vmatprep.subr.bf16.mxu0 0
    %2384 = vmatpush1.bf16.msra.mxu0 0
    %2385 = vmatprep.subr.bf16.mxu0 0
    %2386 = vmatpush1.bf16.msra.mxu0 0
    %2387 = vmatprep.subr.bf16.mxu0 0
    %2388 = vmatpush1.bf16.msra.mxu0 0
    %2389 = vmatprep.subr.bf16.mxu0 0
    %2390 = vmatpush1.bf16.msra.mxu0 0
    %2391 = vmatprep.subr.bf16.mxu0 0
    %2392 = vmatpush1.bf16.msra.mxu0 0
    %2393 = vmatprep.subr.bf16.mxu0 0
    %2394 = vmatpush1.bf16.msra.mxu0 0
    %2395 = vmatprep.mubr.bf16.mxu0 0
    %2396 = vmatmul.mubr.bf16.gmra.mrb[0].mxu0 %v2353
    %v2397 = vpop.f32.mrb[0].mxu0
    %v2398 = vadd.f32 0.0, %v2397
    %v2399 = vpop.f32.mrb[0].mxu0
    %v2400 = vpop.f32.mrb[0].mxu0
    %v2401 = vadd.f32 0.0, %v2400
    %v2402 = vpop.f32.mrb[0].mxu0
    %2403 = vmatprep.mubr.bf16.mxu0 0
    %2404 = vmatmul.mubr.bf16.gmra.mrb[0].mxu0 %v2355
    %v2405 = vpop.f32.mrb[0].mxu0
    %v2406 = vadd.f32 0.0, %v2405
    %v2407 = vpop.f32.mrb[0].mxu0
    %v2408 = vpop.f32.mrb[0].mxu0
    %v2409 = vadd.f32 0.0, %v2408
    %v2410 = vpop.f32.mrb[0].mxu0
    %2411 = vmatprep.mubr.bf16.mxu0 0
    %2412 = vmatmul.mubr.bf16.gmra.mrb[0].mxu0 %v2358
    %v2413 = vpop.f32.mrb[0].mxu0
    %v2414 = vadd.f32 0.0, %v2413
    %v2415 = vpop.f32.mrb[0].mxu0
    %v2416 = vpop.f32.mrb[0].mxu0
    %v2417 = vadd.f32 0.0, %v2416
    %v2418 = vpop.f32.mrb[0].mxu0
    %2419 = vmatprep.mubr.bf16.mxu0 0
    %2420 = vmatmul.mubr.bf16.gmra.mrb[0].mxu0 %v2361
    %v2421 = vpop.f32.mrb[0].mxu0
    %v2422 = vadd.f32 0.0, %v2421
    %v2423 = vpop.f32.mrb[0].mxu0
    %v2424 = vpop.f32.mrb[0].mxu0
    %v2425 = vadd.f32 0.0, %v2424
    %v2426 = vpop.f32.mrb[0].mxu0
    %2427 = vdwg.mxu0
    %v2428 = vadd.f32 %v2335, %v2398
    %v2429 = vadd.f32 %v2336, %v2401
    %v2430 = vadd.f32 %v2337, %v2406
    %v2431 = vadd.f32 %v2338, %v2409
    %v2432 = vadd.f32 %v2339, %v2414
    %v2433 = vadd.f32 %v2340, %v2417
    %v2434 = vadd.f32 %v2341, %v2422
    %v2435 = vadd.f32 %v2342, %v2425
    %v2436 = vld [vmem:[#allocation5 + $0x7] sm:$0x1]
    %v2437 = vlaneseq
    %v2438 = vshrl.u32 %v2437, 7
    %v2439 = vsub.s32 0, %v2438
    %v2440 = vrot.slane %v2436, %v2439
    %v2441 = vadd.f32 %v2428, %v2440
    %v2442 = vadd.f32 %v2429, %v2440
    %v2443 = vadd.f32 %v2430, %v2440
    %v2444 = vadd.f32 %v2431, %v2440
    %v2445 = vadd.f32 %v2432, %v2440
    %v2446 = vadd.f32 %v2433, %v2440
    %v2447 = vadd.f32 %v2434, %v2440
    %v2448 = vadd.f32 %v2435, %v2440
    %v2449 = vsub.f32 0.0, %v2441
    %v2450 = vsub.f32 0.0, %v2442
    %v2451 = vsub.f32 0.0, %v2443
    %v2452 = vsub.f32 0.0, %v2444
    %v2453 = vsub.f32 0.0, %v2445
    %v2454 = vsub.f32 0.0, %v2446
    %v2455 = vsub.f32 0.0, %v2447
    %v2456 = vsub.f32 0.0, %v2448
    %v2457 = vmul.f32 %v2449, 1.442695
    %v2458 = vpow.pop %v2457
    %v2459 = vmul.f32 %v2450, 1.442695
    %v2460 = vpow.pop %v2459
    %v2461 = vmul.f32 %v2451, 1.442695
    %v2462 = vpow.pop %v2461
    %v2463 = vmul.f32 %v2452, 1.442695
    %v2464 = vpow.pop %v2463
    %v2465 = vmul.f32 %v2453, 1.442695
    %v2466 = vpow.pop %v2465
    %v2467 = vmul.f32 %v2454, 1.442695
    %v2468 = vpow.pop %v2467
    %v2469 = vmul.f32 %v2455, 1.442695
    %v2470 = vpow.pop %v2469
    %v2471 = vmul.f32 %v2456, 1.442695
    %v2472 = vpow.pop %v2471
    %v2473 = vadd.f32 %v2458, 1.0
    %v2474 = vadd.f32 %v2460, 1.0
    %v2475 = vadd.f32 %v2462, 1.0
    %v2476 = vadd.f32 %v2464, 1.0
    %v2477 = vadd.f32 %v2466, 1.0
    %v2478 = vadd.f32 %v2468, 1.0
    %v2479 = vadd.f32 %v2470, 1.0
    %v2480 = vadd.f32 %v2472, 1.0
    %v2481 = vrcp.pop %v2473
    %v2482 = vrcp.pop %v2474
    %v2483 = vrcp.pop %v2475
    %v2484 = vrcp.pop %v2476
    %v2485 = vrcp.pop %v2477
    %v2486 = vrcp.pop %v2478
    %v2487 = vrcp.pop %v2479
    %v2488 = vrcp.pop %v2480
    %vm2489 = vcmask 523264
    %2490 = vst.msk [vmem:[#allocation7] sm:$0xff] %vm2489, %v2481
    %2491 = vst.msk [vmem:[#allocation7 + $0x8] sm:$0xff] %vm2489, %v2482
    %2492 = vst.msk [vmem:[#allocation7 + $0x10] sm:$0xff] %vm2489, %v2483
    %2493 = vst.msk [vmem:[#allocation7 + $0x18] sm:$0xff] %vm2489, %v2484
    %2494 = vst.msk [vmem:[#allocation7 + $0x20] sm:$0xff] %vm2489, %v2485
    %2495 = vst.msk [vmem:[#allocation7 + $0x28] sm:$0xff] %vm2489, %v2486
    %2496 = vst.msk [vmem:[#allocation7 + $0x30] sm:$0xff] %vm2489, %v2487
    %2497 = vst.msk [vmem:[#allocation7 + $0x38] sm:$0xff] %vm2489, %v2488
    // Predicated region
    $region22: #{decoder_forward.1} parent=1 // pred_check
      _
    $region23: #{decoder_forward.1} parent=1 // pred_check_branch
      %2499 = sbr.rel (0) target = $region25
    $region24: #{decoder_forward.1} parent=1 // pred_region
      %s2501 = ssub.s32 1024, 1024
      %2502 = vsyncadd [#allocation4], %s2501
      %s2503 = sshll.u32 [#allocation7], 4
      %s2504 = int_to_ptr.vmem [resolvable:$true] %s2503
      %2509 = dma.vmem_to_hbm [thread:$0]  %s2504, 1024, %s3, [#allocation4], 128, 128, 8
    $region25: #{decoder_forward.1} parent=1 // pred_fallthru
      _
    // Predicated region
    $region26: #{decoder_forward.1} parent=1 // pred_check
      _
    $region27: #{decoder_forward.1} parent=1 // pred_check_branch
      %2511 = sbr.rel (0) target = $region29
    $region28: #{decoder_forward.1} parent=1 // pred_region
      %2512 = dma.done [#allocation4], 1024
    $region29: #{decoder_forward.1} parent=1 // pred_fallthru
      _
    %2513 = vsyncpa [#allocation3], 1
    %2514 = vsyncpa [#allocation6], 1
    %2515 = vsyncpa [#allocation4], 1

</llo_original>
